<compile_context>
chip_gen: v5e
topology: v5e:2x2
jax: 0.10.0
libtpu: 0.0.40
codegen_flags: <defaults>
</compile_context>

<pallas_src>
import functools

import jax
import jax.numpy as jnp
from jax import lax
from jax.experimental import pallas as pl
from jax.experimental.pallas import tpu as pltpu


# ----------------------------------------------------------------------------
# Pallas kernels
# ----------------------------------------------------------------------------
def _matmul_bias_kernel(x_ref, w_ref, b_ref, o_ref, *, apply_relu):
    acc = jnp.dot(x_ref[...], w_ref[...], preferred_element_type=jnp.float32)
    acc = acc + b_ref[...]
    if apply_relu:
        acc = jnp.maximum(acc, 0.0)
    o_ref[...] = acc.astype(o_ref.dtype)


def matmul_bias(x, w, b, relu=False, tm=256):
    """out = act(x @ w + b) on the MXU, tiled over rows.  x:(M,K) w:(K,N) b:(N,)."""
    M, K = x.shape
    N = w.shape[1]
    if M < tm or M % tm != 0:
        tm = M                      # small inputs: single full-array tile
    grid = (M // tm,)
    return pl.pallas_call(
        functools.partial(_matmul_bias_kernel, apply_relu=relu),
        out_shape=jax.ShapeDtypeStruct((M, N), jnp.float32),
        grid=grid,
        in_specs=[
            pl.BlockSpec((tm, K), lambda i: (i, 0)),
            pl.BlockSpec((K, N), lambda i: (0, 0)),
            pl.BlockSpec((1, N), lambda i: (0, 0)),
        ],
        out_specs=pl.BlockSpec((tm, N), lambda i: (i, 0)),
        compiler_params=pltpu.CompilerParams(dimension_semantics=("parallel",)),
    )(x, w, b.reshape(1, N))


def _struct_stats_kernel(f_ref, o_ref, *, eps):
    """Fused Gram + [mean, std] for one feature map.

    f_ref : (1, HW, C)   channels-last (channels on the lane axis)
    o_ref : (1, C+2, C)  rows 0..C-1 = Gram (F^T F / HW), row C = mean, row C+1 = std
    """
    f = f_ref[0].astype(jnp.float32)                               # (HW, C)
    hw, c = f.shape
    # Gram without materializing a transpose: contract the spatial axis of both.
    g = lax.dot_general(f, f, (((0,), (0,)), ((), ())),
                        preferred_element_type=jnp.float32) * (1.0 / hw)   # (C, C)
    mean = jnp.mean(f, axis=0, keepdims=True)                      # (1, C)
    # diag(G) = E[f^2] per channel -> reuse the MXU result for the variance.
    rows = lax.broadcasted_iota(jnp.int32, (c, c), 0)
    cols = lax.broadcasted_iota(jnp.int32, (c, c), 1)
    e2 = jnp.sum(jnp.where(rows == cols, g, 0.0), axis=0, keepdims=True)   # (1, C)
    var = jnp.maximum(e2 - mean * mean, 0.0)
    std = jnp.sqrt(var + eps)                                      # (1, C)

    o_ref[0, 0:c, :] = g
    o_ref[0, c:c + 1, :] = mean
    o_ref[0, c + 1:c + 2, :] = std


def struct_and_stats(feats_flat, eps=1e-6):
    """feats_flat: (G, HW, C) -> (gram (G,C,C), mean (G,C), std (G,C)) in one call."""
    Gn, HW, C = feats_flat.shape
    out = pl.pallas_call(
        functools.partial(_struct_stats_kernel, eps=eps),
        out_shape=jax.ShapeDtypeStruct((Gn, C + 2, C), jnp.float32),
        grid=(Gn,),
        in_specs=[pl.BlockSpec((1, HW, C), lambda g: (g, 0, 0))],
        out_specs=pl.BlockSpec((1, C + 2, C), lambda g: (g, 0, 0)),
        compiler_params=pltpu.CompilerParams(dimension_semantics=("parallel",)),
    )(feats_flat)
    gram = out[:, :C, :]
    mean = out[:, C, :]
    std = out[:, C + 1, :]
    return gram, mean, std


# ----------------------------------------------------------------------------
# Channels-last glue (layout plumbing in plain JAX; XLA fuses these)
# ----------------------------------------------------------------------------
def avg_pool_nhwc(x, k):
    B, H, W, C = x.shape
    return x.reshape(B, H // k, k, W // k, k, C).mean(axis=(2, 4))


def pad_to_nhwc(x, size):
    """PadTo((h, w), pad_mode='constant'): constant-zero pad spatial dims to target."""
    # TODO(synk): PadTo source not given; assuming centered constant-zero padding.
    B, H, W, C = x.shape
    th, tw = size
    ph, pw = th - H, tw - W
    return jnp.pad(
        x, ((0, 0), (ph // 2, ph - ph // 2), (pw // 2, pw - pw // 2), (0, 0)),
        mode="constant",
    )


# ----------------------------------------------------------------------------
# SSTKAD forward (channels-last end-to-end; single boundary transpose)
# ----------------------------------------------------------------------------
def sstkad_forward(params, x_nchw):
    B, Cin, H, W = x_nchw.shape

    # Single NCHW -> NHWC transpose at the boundary; flatten pixels.
    xf = jnp.transpose(x_nchw, (0, 2, 3, 1)).reshape(B * H * W, Cin)      # (512, 4)

    # feature_extractor: 1x1 conv 4->8 + ReLU
    hf = matmul_bias(xf, params["fe_w"], params["fe_b"], relu=True)       # (512, 8)

    # student conv (8->16) and teacher conv (8->64) fused into one matmul on the
    # shared input: (512, 8) @ (8, 80), bias + ReLU in the epilogue, split after.
    w_fused = jnp.concatenate([params["st_w"], params["te_w"]], axis=1)   # (8, 80)
    b_fused = jnp.concatenate([params["st_b"], params["te_b"]], axis=0)   # (80,)
    conv = matmul_bias(hf, w_fused, b_fused, relu=True)                   # (512, 80)
    conv = conv.reshape(B, H, W, 16 + 64)
    st_conv = conv[..., :16]                                              # (B,16,16,16)
    te_conv = conv[..., 16:]                                              # (B,16,16,64)

    # Pooling (channels-last, no transposes; XLA fuses the reshape+mean).
    feats_student = avg_pool_nhwc(st_conv, 2)                             # (B, 8, 8,16)
    feats_teacher = avg_pool_nhwc(te_conv, 4)                             # (B, 4, 4,64)

    # GAP heads: global mean commutes with the even avg-pool, so pool directly
    # from the conv output.  2-row matmuls stay in plain jnp (no Pallas launch).
    pooled_s = st_conv.mean(axis=(1, 2))                                  # (B, 16)
    pooled_t = te_conv.mean(axis=(1, 2))                                  # (B, 64)
    output_student = jnp.dot(pooled_s, params["st_head_w"]) + params["st_head_b"]
    output_teacher = jnp.dot(pooled_t, params["te_head_w"]) + params["te_head_b"]

    # self.feature_reduce = nn.Conv2d(64, 16, 1); self.relu = nn.ReLU()
    Bt, Ht, Wt, Ct = feats_teacher.shape
    ftf = matmul_bias(feats_teacher.reshape(Bt * Ht * Wt, Ct),
                      params["fr_w"], params["fr_b"], relu=True)          # (B*16, 16)
    feats_teacher = ftf.reshape(Bt, Ht, Wt, 16)                           # (B, 4, 4,16)

    # PadTo student spatial size with constant zeros.
    sh, sw = feats_student.shape[1], feats_student.shape[2]
    feats_teacher = pad_to_nhwc(feats_teacher, (sh, sw))                  # (B, 8, 8,16)

    # Fused struct + stats for BOTH feature tensors in a single pallas_call:
    # stack along the grid axis, each grid step emits a lane-dense (C+2, C) slab.
    C = feats_student.shape[-1]
    HW = sh * sw
    stacked = jnp.concatenate(
        [feats_student.reshape(B, HW, C), feats_teacher.reshape(B, HW, C)], axis=0
    )                                                                     # (2B, HW, C)
    gram, mean, std = struct_and_stats(stacked)

    struct_feats_student = gram[:B]                                       # (B, C, C)
    struct_feats_teacher = gram[B:]                                       # (B, C, C)
    stats_feats_student = jnp.stack([mean[:B], std[:B]], axis=-1)         # (B, C, 2)
    stats_feats_teacher = jnp.stack([mean[B:], std[B:]], axis=-1)         # (B, C, 2)

    return (struct_feats_student, struct_feats_teacher,
            stats_feats_student, stats_feats_teacher,
            output_student, output_teacher)


# ----------------------------------------------------------------------------
# Deterministic parameter init
# ----------------------------------------------------------------------------
def init_params(key):
    keys = jax.random.split(key, 6)

    def dense(k, fan_in, fan_out):
        kw, kb = jax.random.split(k)
        scale = 1.0 / jnp.sqrt(jnp.float32(fan_in))
        w = jax.random.uniform(kw, (fan_in, fan_out), jnp.float32, -scale, scale)
        b = jax.random.uniform(kb, (fan_out,), jnp.float32, -scale, scale)
        return w, b

    p = {}
    p["fe_w"], p["fe_b"] = dense(keys[0], 4, 8)            # feature_extractor conv
    p["st_w"], p["st_b"] = dense(keys[1], 8, 16)           # student conv
    p["st_head_w"], p["st_head_b"] = dense(keys[2], 16, 10)
    p["te_w"], p["te_b"] = dense(keys[3], 8, 64)           # teacher conv
    p["te_head_w"], p["te_head_b"] = dense(keys[4], 64, 10)
    p["fr_w"], p["fr_b"] = dense(keys[5], 64, 16)          # nn.Conv2d(64, 16, 1)
    return p


if __name__ == "__main__":
    key = jax.random.PRNGKey(0)
    pkey, xkey = jax.random.split(key)
    params = init_params(pkey)
    x = jax.random.normal(xkey, (2, 4, 16, 16), jnp.float32)   # NCHW, like PyTorch

    outs = jax.jit(functools.partial(sstkad_forward, params))(x)
    outs = jax.block_until_ready(outs)

    struct_s, struct_t, stats_s, stats_t, out_s, out_t = outs
    assert struct_s.shape == (2, 16, 16)
    assert struct_t.shape == (2, 16, 16)
    assert stats_s.shape == (2, 16, 2)
    assert stats_t.shape == (2, 16, 2)
    assert out_s.shape == (2, 10)
    assert out_t.shape == (2, 10)
    assert all(bool(jnp.all(jnp.isfinite(o))) for o in outs)

    print("KERNEL_OK")
</pallas_src>

<mosaic_0001>
module attributes {stable_mosaic.version = 11 : i64} {
  func.func @_matmul_bias_kernel(%arg0: i32, %arg1: memref<256x8xf32, #tpu.memory_space<vmem>>, %arg2: memref<8x80xf32, #tpu.memory_space<vmem>>, %arg3: memref<1x80xf32, #tpu.memory_space<vmem>>, %arg4: memref<256x80xf32, #tpu.memory_space<vmem>>) attributes {dimension_semantics = [#tpu.dimension_semantics<parallel>], iteration_bounds = array<i64: 2>, scalar_prefetch = 0 : i64, scratch_operands = 0 : i64, tpu.core_type = #tpu.core_type<tc>, window_params = [{transform_indices = @transform_0, window_bounds = array<i64: 256, 8>}, {pipeline_mode = #tpu.pipeline_mode<synchronous>, transform_indices = @transform_1, window_bounds = array<i64: 8, 80>}, {pipeline_mode = #tpu.pipeline_mode<synchronous>, transform_indices = @transform_2, window_bounds = array<i64: 1, 80>}, {transform_indices = @transform_3, window_bounds = array<i64: 256, 80>}]} {
    %c0 = arith.constant 0 : index
    %c0_0 = arith.constant 0 : index
    %0 = vector.load %arg1[%c0, %c0_0] : memref<256x8xf32, #tpu.memory_space<vmem>>, vector<256x8xf32>
    %c0_1 = arith.constant 0 : index
    %c0_2 = arith.constant 0 : index
    %1 = vector.load %arg2[%c0_1, %c0_2] : memref<8x80xf32, #tpu.memory_space<vmem>>, vector<8x80xf32>
    %cst = arith.constant dense<0.000000e+00> : vector<256x80xf32>
    %2 = tpu.matmul %0, %1, %cst {dimension_numbers = #tpu.dot_dimension_numbers<[1], [0], [0], [1], [0, 0, 1, 1], [], []>} : vector<256x8xf32>, vector<8x80xf32>, vector<256x80xf32> -> vector<256x80xf32>
    %c0_3 = arith.constant 0 : index
    %c0_4 = arith.constant 0 : index
    %3 = vector.load %arg3[%c0_3, %c0_4] : memref<1x80xf32, #tpu.memory_space<vmem>>, vector<1x80xf32>
    %4 = vector.broadcast %3 : vector<1x80xf32> to vector<256x80xf32>
    %5 = arith.addf %2, %4 : vector<256x80xf32>
    %cst_5 = arith.constant 0.000000e+00 : f32
    %6 = vector.broadcast %cst_5 : f32 to vector<256x80xf32>
    %7 = arith.maximumf %5, %6 : vector<256x80xf32>
    %c0_6 = arith.constant 0 : index
    %c0_7 = arith.constant 0 : index
    %8 = vector.load %arg4[%c0_6, %c0_7] : memref<256x80xf32, #tpu.memory_space<vmem>>, vector<256x80xf32>
    tpu.vector_store %arg4[%c0_6, %c0_7], %7 {strides = array<i32>} : memref<256x80xf32, #tpu.memory_space<vmem>>, vector<256x80xf32>,
    return
  }
  func.func @transform_0(%arg0: i32) -> (i32, i32) {
    %c0_i32 = arith.constant 0 : i32
    %c0_i32_0 = arith.constant 0 : i32
    return %arg0, %c0_i32 : i32, i32
  }
  func.func @transform_1(%arg0: i32) -> (i32, i32) {
    %c0_i32 = arith.constant 0 : i32
    %c0_i32_0 = arith.constant 0 : i32
    %c0_i32_1 = arith.constant 0 : i32
    return %c0_i32, %c0_i32_0 : i32, i32
  }
  func.func @transform_2(%arg0: i32) -> (i32, i32) {
    %c0_i32 = arith.constant 0 : i32
    %c0_i32_0 = arith.constant 0 : i32
    %c0_i32_1 = arith.constant 0 : i32
    return %c0_i32, %c0_i32_0 : i32, i32
  }
  func.func @transform_3(%arg0: i32) -> (i32, i32) {
    %c0_i32 = arith.constant 0 : i32
    %c0_i32_0 = arith.constant 0 : i32
    return %arg0, %c0_i32 : i32, i32
  }
}

module attributes {stable_mosaic.version = 11 : i64} {
  func.func @_matmul_bias_kernel(%arg0: i32, %arg1: memref<256x4xf32, #tpu.memory_space<vmem>>, %arg2: memref<4x8xf32, #tpu.memory_space<vmem>>, %arg3: memref<1x8xf32, #tpu.memory_space<vmem>>, %arg4: memref<256x8xf32, #tpu.memory_space<vmem>>) attributes {dimension_semantics = [#tpu.dimension_semantics<parallel>], iteration_bounds = array<i64: 2>, scalar_prefetch = 0 : i64, scratch_operands = 0 : i64, tpu.core_type = #tpu.core_type<tc>, window_params = [{transform_indices = @transform_0, window_bounds = array<i64: 256, 4>}, {pipeline_mode = #tpu.pipeline_mode<synchronous>, transform_indices = @transform_1, window_bounds = array<i64: 4, 8>}, {pipeline_mode = #tpu.pipeline_mode<synchronous>, transform_indices = @transform_2, window_bounds = array<i64: 1, 8>}, {transform_indices = @transform_3, window_bounds = array<i64: 256, 8>}]} {
    %c0 = arith.constant 0 : index
    %c0_0 = arith.constant 0 : index
    %0 = vector.load %arg1[%c0, %c0_0] : memref<256x4xf32, #tpu.memory_space<vmem>>, vector<256x4xf32>
    %c0_1 = arith.constant 0 : index
    %c0_2 = arith.constant 0 : index
    %1 = vector.load %arg2[%c0_1, %c0_2] : memref<4x8xf32, #tpu.memory_space<vmem>>, vector<4x8xf32>
    %cst = arith.constant dense<0.000000e+00> : vector<256x8xf32>
    %2 = tpu.matmul %0, %1, %cst {dimension_numbers = #tpu.dot_dimension_numbers<[1], [0], [0], [1], [0, 0, 1, 1], [], []>} : vector<256x4xf32>, vector<4x8xf32>, vector<256x8xf32> -> vector<256x8xf32>
    %c0_3 = arith.constant 0 : index
    %c0_4 = arith.constant 0 : index
    %3 = vector.load %arg3[%c0_3, %c0_4] : memref<1x8xf32, #tpu.memory_space<vmem>>, vector<1x8xf32>
    %4 = vector.broadcast %3 : vector<1x8xf32> to vector<256x8xf32>
    %5 = arith.addf %2, %4 : vector<256x8xf32>
    %cst_5 = arith.constant 0.000000e+00 : f32
    %6 = vector.broadcast %cst_5 : f32 to vector<256x8xf32>
    %7 = arith.maximumf %5, %6 : vector<256x8xf32>
    %c0_6 = arith.constant 0 : index
    %c0_7 = arith.constant 0 : index
    %8 = vector.load %arg4[%c0_6, %c0_7] : memref<256x8xf32, #tpu.memory_space<vmem>>, vector<256x8xf32>
    tpu.vector_store %arg4[%c0_6, %c0_7], %7 {strides = array<i32>} : memref<256x8xf32, #tpu.memory_space<vmem>>, vector<256x8xf32>,
    return
  }
  func.func @transform_0(%arg0: i32) -> (i32, i32) {
    %c0_i32 = arith.constant 0 : i32
    %c0_i32_0 = arith.constant 0 : i32
    return %arg0, %c0_i32 : i32, i32
  }
  func.func @transform_1(%arg0: i32) -> (i32, i32) {
    %c0_i32 = arith.constant 0 : i32
    %c0_i32_0 = arith.constant 0 : i32
    %c0_i32_1 = arith.constant 0 : i32
    return %c0_i32, %c0_i32_0 : i32, i32
  }
  func.func @transform_2(%arg0: i32) -> (i32, i32) {
    %c0_i32 = arith.constant 0 : i32
    %c0_i32_0 = arith.constant 0 : i32
    %c0_i32_1 = arith.constant 0 : i32
    return %c0_i32, %c0_i32_0 : i32, i32
  }
  func.func @transform_3(%arg0: i32) -> (i32, i32) {
    %c0_i32 = arith.constant 0 : i32
    %c0_i32_0 = arith.constant 0 : i32
    return %arg0, %c0_i32 : i32, i32
  }
}

module attributes {stable_mosaic.version = 11 : i64} {
  func.func @_matmul_bias_kernel(%arg0: i32, %arg1: memref<32x64xf32, #tpu.memory_space<vmem>>, %arg2: memref<64x16xf32, #tpu.memory_space<vmem>>, %arg3: memref<1x16xf32, #tpu.memory_space<vmem>>, %arg4: memref<32x16xf32, #tpu.memory_space<vmem>>) attributes {dimension_semantics = [#tpu.dimension_semantics<parallel>], iteration_bounds = array<i64: 1>, scalar_prefetch = 0 : i64, scratch_operands = 0 : i64, tpu.core_type = #tpu.core_type<tc>, window_params = [{transform_indices = @transform_0, window_bounds = array<i64: 32, 64>}, {pipeline_mode = #tpu.pipeline_mode<synchronous>, transform_indices = @transform_1, window_bounds = array<i64: 64, 16>}, {pipeline_mode = #tpu.pipeline_mode<synchronous>, transform_indices = @transform_2, window_bounds = array<i64: 1, 16>}, {transform_indices = @transform_3, window_bounds = array<i64: 32, 16>}]} {
    %c0 = arith.constant 0 : index
    %c0_0 = arith.constant 0 : index
    %0 = vector.load %arg1[%c0, %c0_0] : memref<32x64xf32, #tpu.memory_space<vmem>>, vector<32x64xf32>
    %c0_1 = arith.constant 0 : index
    %c0_2 = arith.constant 0 : index
    %1 = vector.load %arg2[%c0_1, %c0_2] : memref<64x16xf32, #tpu.memory_space<vmem>>, vector<64x16xf32>
    %cst = arith.constant dense<0.000000e+00> : vector<32x16xf32>
    %2 = tpu.matmul %0, %1, %cst {dimension_numbers = #tpu.dot_dimension_numbers<[1], [0], [0], [1], [0, 0, 1, 1], [], []>} : vector<32x64xf32>, vector<64x16xf32>, vector<32x16xf32> -> vector<32x16xf32>
    %c0_3 = arith.constant 0 : index
    %c0_4 = arith.constant 0 : index
    %3 = vector.load %arg3[%c0_3, %c0_4] : memref<1x16xf32, #tpu.memory_space<vmem>>, vector<1x16xf32>
    %4 = vector.broadcast %3 : vector<1x16xf32> to vector<32x16xf32>
    %5 = arith.addf %2, %4 : vector<32x16xf32>
    %cst_5 = arith.constant 0.000000e+00 : f32
    %6 = vector.broadcast %cst_5 : f32 to vector<32x16xf32>
    %7 = arith.maximumf %5, %6 : vector<32x16xf32>
    %c0_6 = arith.constant 0 : index
    %c0_7 = arith.constant 0 : index
    %8 = vector.load %arg4[%c0_6, %c0_7] : memref<32x16xf32, #tpu.memory_space<vmem>>, vector<32x16xf32>
    tpu.vector_store %arg4[%c0_6, %c0_7], %7 {strides = array<i32>} : memref<32x16xf32, #tpu.memory_space<vmem>>, vector<32x16xf32>,
    return
  }
  func.func @transform_0(%arg0: i32) -> (i32, i32) {
    %c0_i32 = arith.constant 0 : i32
    %c0_i32_0 = arith.constant 0 : i32
    return %arg0, %c0_i32 : i32, i32
  }
  func.func @transform_1(%arg0: i32) -> (i32, i32) {
    %c0_i32 = arith.constant 0 : i32
    %c0_i32_0 = arith.constant 0 : i32
    %c0_i32_1 = arith.constant 0 : i32
    return %c0_i32, %c0_i32_0 : i32, i32
  }
  func.func @transform_2(%arg0: i32) -> (i32, i32) {
    %c0_i32 = arith.constant 0 : i32
    %c0_i32_0 = arith.constant 0 : i32
    %c0_i32_1 = arith.constant 0 : i32
    return %c0_i32, %c0_i32_0 : i32, i32
  }
  func.func @transform_3(%arg0: i32) -> (i32, i32) {
    %c0_i32 = arith.constant 0 : i32
    %c0_i32_0 = arith.constant 0 : i32
    return %arg0, %c0_i32 : i32, i32
  }
}

module attributes {stable_mosaic.version = 11 : i64} {
  func.func @_struct_stats_kernel(%arg0: i32, %arg1: memref<1x64x16xf32, #tpu.memory_space<vmem>>, %arg2: memref<1x18x16xf32, #tpu.memory_space<vmem>>) attributes {dimension_semantics = [#tpu.dimension_semantics<parallel>], iteration_bounds = array<i64: 4>, scalar_prefetch = 0 : i64, scratch_operands = 0 : i64, tpu.core_type = #tpu.core_type<tc>, window_params = [{transform_indices = @transform_0, window_bounds = array<i64: 1, 64, 16>}, {transform_indices = @transform_1, window_bounds = array<i64: 1, 18, 16>}]} {
    %c0 = arith.constant 0 : index
    %c0_0 = arith.constant 0 : index
    %c0_1 = arith.constant 0 : index
    %0 = vector.load %arg1[%c0, %c0_0, %c0_1] : memref<1x64x16xf32, #tpu.memory_space<vmem>>, vector<1x64x16xf32>
    %1 = vector.shape_cast %0 : vector<1x64x16xf32> to vector<64x16xf32>
    %cst = arith.constant dense<0.000000e+00> : vector<16x16xf32>
    %2 = tpu.matmul %1, %1, %cst {dimension_numbers = #tpu.dot_dimension_numbers<[0], [0], [1], [1], [0, 1, 1, 1], [], []>} : vector<64x16xf32>, vector<64x16xf32>, vector<16x16xf32> -> vector<16x16xf32>
    %cst_2 = arith.constant 1.562500e-02 : f32
    %3 = vector.broadcast %cst_2 : f32 to vector<16x16xf32>
    %4 = arith.mulf %2, %3 : vector<16x16xf32>
    %cst_3 = arith.constant dense<0.000000e+00> : vector<16xf32>
    %5 = vector.multi_reduction <add>, %1, %cst_3 [0] : vector<64x16xf32> to vector<16xf32>
    %6 = vector.shape_cast %5 : vector<16xf32> to vector<1x16xf32>
    %cst_4 = arith.constant 6.400000e+01 : f32
    %7 = vector.broadcast %cst_4 : f32 to vector<1x16xf32>
    %8 = arith.divf %6, %7 : vector<1x16xf32>
    %9 = tpu.iota {dimensions = array<i32: 0>} : vector<16x16xi32>
    %10 = tpu.iota {dimensions = array<i32: 1>} : vector<16x16xi32>
    %11 = arith.cmpi eq, %9, %10 : vector<16x16xi32>
    %cst_5 = arith.constant 0.000000e+00 : f32
    %12 = vector.broadcast %cst_5 : f32 to vector<16x16xf32>
    %13 = arith.select %11, %4, %12 : vector<16x16xi1>, vector<16x16xf32>
    %cst_6 = arith.constant dense<0.000000e+00> : vector<16xf32>
    %14 = vector.multi_reduction <add>, %13, %cst_6 [0] : vector<16x16xf32> to vector<16xf32>
    %15 = vector.shape_cast %14 : vector<16xf32> to vector<1x16xf32>
    %16 = arith.mulf %8, %8 : vector<1x16xf32>
    %17 = arith.subf %15, %16 : vector<1x16xf32>
    %cst_7 = arith.constant 0.000000e+00 : f32
    %18 = vector.broadcast %cst_7 : f32 to vector<1x16xf32>
    %19 = arith.maximumf %17, %18 : vector<1x16xf32>
    %cst_8 = arith.constant 9.99999997E-7 : f32
    %20 = vector.broadcast %cst_8 : f32 to vector<1x16xf32>
    %21 = arith.addf %19, %20 : vector<1x16xf32>
    %22 = math.sqrt %21 : vector<1x16xf32>
    %c0_9 = arith.constant 0 : index
    %c0_10 = arith.constant 0 : index
    %c0_11 = arith.constant 0 : index
    %23 = vector.load %arg2[%c0_9, %c0_10, %c0_11] : memref<1x18x16xf32, #tpu.memory_space<vmem>>, vector<1x16x16xf32>
    %24 = vector.shape_cast %23 : vector<1x16x16xf32> to vector<16x16xf32>
    %25 = vector.shape_cast %4 : vector<16x16xf32> to vector<1x16x16xf32>
    tpu.vector_store %arg2[%c0_9, %c0_10, %c0_11], %25 {strides = array<i32>} : memref<1x18x16xf32, #tpu.memory_space<vmem>>, vector<1x16x16xf32>,
    %c0_12 = arith.constant 0 : index
    %c16 = arith.constant 16 : index
    %c0_13 = arith.constant 0 : index
    %26 = vector.load %arg2[%c0_12, %c16, %c0_13] : memref<1x18x16xf32, #tpu.memory_space<vmem>>, vector<1x1x16xf32>
    %27 = vector.shape_cast %26 : vector<1x1x16xf32> to vector<1x16xf32>
    %28 = vector.shape_cast %8 : vector<1x16xf32> to vector<1x1x16xf32>
    tpu.vector_store %arg2[%c0_12, %c16, %c0_13], %28 {strides = array<i32>} : memref<1x18x16xf32, #tpu.memory_space<vmem>>, vector<1x1x16xf32>,
    %c0_14 = arith.constant 0 : index
    %c17 = arith.constant 17 : index
    %c0_15 = arith.constant 0 : index
    %29 = vector.load %arg2[%c0_14, %c17, %c0_15] : memref<1x18x16xf32, #tpu.memory_space<vmem>>, vector<1x1x16xf32>
    %30 = vector.shape_cast %29 : vector<1x1x16xf32> to vector<1x16xf32>
    %31 = vector.shape_cast %22 : vector<1x16xf32> to vector<1x1x16xf32>
    tpu.vector_store %arg2[%c0_14, %c17, %c0_15], %31 {strides = array<i32>} : memref<1x18x16xf32, #tpu.memory_space<vmem>>, vector<1x1x16xf32>,
    return
  }
  func.func @transform_0(%arg0: i32) -> (i32, i32, i32) {
    %c0_i32 = arith.constant 0 : i32
    %c0_i32_0 = arith.constant 0 : i32
    %c0_i32_1 = arith.constant 0 : i32
    return %arg0, %c0_i32, %c0_i32_0 : i32, i32, i32
  }
  func.func @transform_1(%arg0: i32) -> (i32, i32, i32) {
    %c0_i32 = arith.constant 0 : i32
    %c0_i32_0 = arith.constant 0 : i32
    %c0_i32_1 = arith.constant 0 : i32
    return %arg0, %c0_i32, %c0_i32_0 : i32, i32, i32
  }
}

</mosaic_0001>

<llo_original>
// kernel: sstkad_forward.4
$region0: #{sstkad_forward.4}
  #allocation0 [shape = 'u32[]', space=smem, size = 0x4, offset = 0x4, fixed_abs, tag = 'smem constant byte address 0x4 - core index']
  #allocation1 [shape = 'u32[72,128]{1,0:T(1,128)}', space=vmem, size = 0x9000, scoped, tag = 'internal scratch']
  %s0 = inlined_call_operand.vmem [shape: f32[512,4], index: 0, kind: input, shape index: {}]
  %s1 = inlined_call_operand.vmem [shape: f32[4,8], index: 1, kind: input, shape index: {}]
  %s2 = inlined_call_operand.vmem [shape: f32[1,8], index: 2, kind: input, shape index: {}]
  %s3 = inlined_call_operand.vmem [shape: f32[512,8], index: 3, kind: output, shape index: {}]
  %s4 = sld [smem:[#allocation0]]
  $region45: #{sstkad_forward.4} parent=0
    _
  %s6 = ssub.s32 1, %s4
  %s7 = scalar_select 0, %s6, %s4
  loop: start=0, step=1, limit=4
  $region2: #{sstkad_forward.4} parent=0 // loop_pre_header
    _
  $region3: #{sstkad_forward.4} parent=0 // loop_header
    %s9 = sphi 0, %s13
    %p10 = scmp.ge.s32.totalorder %s9, 4
    %s19 = sphi 0, %s21
    %s22 = sphi 0, %s19
    %s23 = sphi 0, %s22
    %s39 = sphi 0, %s23
    %s43 = sphi 0, %s43
    %s45 = sphi 0, %s43
    %s46 = sphi 0, %s45
    %s60 = sphi 0, %s46
    %s64 = sphi 0, %s64
    %s66 = sphi 0, %s64
    %s67 = sphi 0, %s66
    %s81 = sphi 0, %s67
    %s87 = sphi 0, %s89
    %s90 = sphi 0, %s87
    %s91 = sphi 0, %s90
    %s107 = sphi 0, %s91
  $region4: #{sstkad_forward.4} parent=0 // loop_header_branch
    %12 = sbr.rel (%p10) target = $region8
  $region5: #{sstkad_forward.4} parent=0 // loop_body
    %s14 = ssub.s32 %s9, 1
    %s15 = ssub.s32 %s9, 2
    %s16 = sadd.s32 %s9, 1
    %s17 = ssub.s32 %s9, %s16
    %p18 = scmp.eq.s32.totalorder %s17, 0
    %s20 = sadd.s32 %s19, 1
    %s21 = scalar_select %p18, %s19, %s20
    %p24 = pneg %p18
    %p25 = scmp.eq.s32.totalorder %s9, 1
    %p26 = por %p24, %p25
    %p27 = scmp.ne.s32.totalorder %s19, %s22
    %p28 = scmp.eq.s32.totalorder %s9, 0
    %p29 = por %p27, %p28
    %p30 = scmp.ne.s32.totalorder %s19, %s22
    %p31 = scmp.eq.s32.totalorder %s14, 1
    %p32 = por %p30, %p31
    %p33 = scmp.ne.s32.totalorder %s22, %s23
    %p34 = scmp.eq.s32.totalorder %s14, 0
    %p35 = por %p33, %p34
    %p36 = scmp.ne.s32.totalorder %s22, %s23
    %p37 = scmp.eq.s32.totalorder %s15, 1
    %p38 = por %p36, %p37
    %p40 = scmp.ne.s32.totalorder %s23, %s39
    %p41 = scmp.eq.s32.totalorder %s15, 0
    %p42 = por %p40, %p41
    %s44 = sadd.s32 %s43, 1
    %p47 = scmp.eq.s32.totalorder %s9, 1
    %p48 = scmp.ne.s32.totalorder %s43, %s45
    %p49 = scmp.eq.s32.totalorder %s9, 0
    %p50 = por %p48, %p49
    %p51 = scmp.ne.s32.totalorder %s43, %s45
    %p52 = scmp.eq.s32.totalorder %s14, 1
    %p53 = por %p51, %p52
    %p54 = scmp.ne.s32.totalorder %s45, %s46
    %p55 = scmp.eq.s32.totalorder %s14, 0
    %p56 = por %p54, %p55
    %p57 = scmp.ne.s32.totalorder %s45, %s46
    %p58 = scmp.eq.s32.totalorder %s15, 1
    %p59 = por %p57, %p58
    %p61 = scmp.ne.s32.totalorder %s46, %s60
    %p62 = scmp.eq.s32.totalorder %s15, 0
    %p63 = por %p61, %p62
    %s65 = sadd.s32 %s64, 1
    %p68 = scmp.eq.s32.totalorder %s9, 1
    %p69 = scmp.ne.s32.totalorder %s64, %s66
    %p70 = scmp.eq.s32.totalorder %s9, 0
    %p71 = por %p69, %p70
    %p72 = scmp.ne.s32.totalorder %s64, %s66
    %p73 = scmp.eq.s32.totalorder %s14, 1
    %p74 = por %p72, %p73
    %p75 = scmp.ne.s32.totalorder %s66, %s67
    %p76 = scmp.eq.s32.totalorder %s14, 0
    %p77 = por %p75, %p76
    %p78 = scmp.ne.s32.totalorder %s66, %s67
    %p79 = scmp.eq.s32.totalorder %s15, 1
    %p80 = por %p78, %p79
    %p82 = scmp.ne.s32.totalorder %s67, %s81
    %p83 = scmp.eq.s32.totalorder %s15, 0
    %p84 = por %p82, %p83
    %s85 = ssub.s32 %s9, %s16
    %p86 = scmp.eq.s32.totalorder %s85, 0
    %s88 = sadd.s32 %s87, 1
    %s89 = scalar_select %p86, %s87, %s88
    %p92 = pneg %p86
    %p93 = scmp.eq.s32.totalorder %s9, 1
    %p94 = por %p92, %p93
    %p95 = scmp.ne.s32.totalorder %s87, %s90
    %p96 = scmp.eq.s32.totalorder %s9, 0
    %p97 = por %p95, %p96
    %p98 = scmp.ne.s32.totalorder %s87, %s90
    %p99 = scmp.eq.s32.totalorder %s14, 1
    %p100 = por %p98, %p99
    %p101 = scmp.ne.s32.totalorder %s90, %s91
    %p102 = scmp.eq.s32.totalorder %s14, 0
    %p103 = por %p101, %p102
    %p104 = scmp.ne.s32.totalorder %s90, %s91
    %p105 = scmp.eq.s32.totalorder %s15, 1
    %p106 = por %p104, %p105
    %p108 = scmp.ne.s32.totalorder %s91, %s107
    %p109 = scmp.eq.s32.totalorder %s15, 0
    %p110 = por %p108, %p109
    %p111 = scmp.le.s32.totalorder 1, %s9
    %p112 = scmp.lt.s32.totalorder %s9, 3
    %p113 = pnand %p111, %p112
    %p114 = pneg %p113
    // Predicated region
    $region9: #{sstkad_forward.4} parent=5 // pred_check
      _
    $region10: #{sstkad_forward.4} parent=5 // pred_check_branch
      %116 = sbr.rel (%p113) target = $region12
    $region11: #{sstkad_forward.4} parent=5 // pred_region
      %s117 = ssub.s32 %s9, 1
      // Predicated region
      $region13: #{sstkad_forward.4} parent=11 // pred_check
        %p118 = pneg %p56
      $region14: #{sstkad_forward.4} parent=11 // pred_check_branch
        %120 = sbr.rel (%p118) target = $region16
      $region15: #{sstkad_forward.4} parent=11 // pred_region
        _
      $region16: #{sstkad_forward.4} parent=11 // pred_fallthru
        _
      // Predicated region
      $region17: #{sstkad_forward.4} parent=11 // pred_check
        %p121 = pneg %p77
      $region18: #{sstkad_forward.4} parent=11 // pred_check_branch
        %123 = sbr.rel (%p121) target = $region20
      $region19: #{sstkad_forward.4} parent=11 // pred_region
        _
      $region20: #{sstkad_forward.4} parent=11 // pred_fallthru
        _
    $region12: #{sstkad_forward.4} parent=5 // pred_fallthru
      _
    %p124 = scmp.lt.s32.totalorder %s9, 2
    // Predicated region
    $region21: #{sstkad_forward.4} parent=5 // pred_check
      %p125 = pneg %p124
    $region22: #{sstkad_forward.4} parent=5 // pred_check_branch
      %127 = sbr.rel (%p125) target = $region24
    $region23: #{sstkad_forward.4} parent=5 // pred_region
      // Predicated region
      $region25: #{sstkad_forward.4} parent=23 // pred_check
        %p128 = pneg %p29
      $region26: #{sstkad_forward.4} parent=23 // pred_check_branch
        %130 = sbr.rel (%p128) target = $region28
      $region27: #{sstkad_forward.4} parent=23 // pred_region
        %s131 = smul.u32 32, %s9
        %p132 = scmp.lt.s32.totalorder %s131, 63
        %s133 = scalar_select %p132, %s131, 63
        %s134 = smul.addr %s133, 8
        %s135 = scalar_lea.vmem %s0, %s134
        %s136 = smul.u32 32, %s9
      $region28: #{sstkad_forward.4} parent=23 // pred_fallthru
        _
    $region24: #{sstkad_forward.4} parent=5 // pred_fallthru
      _
    %p137 = scmp.le.s32.totalorder 1, %s9
    %p138 = scmp.lt.s32.totalorder %s9, 3
    %p139 = pnand %p137, %p138
    %p140 = pneg %p139
    // Predicated region
    $region29: #{sstkad_forward.4} parent=5 // pred_check
      _
    $region30: #{sstkad_forward.4} parent=5 // pred_check_branch
      %142 = sbr.rel (%p139) target = $region32
    $region31: #{sstkad_forward.4} parent=5 // pred_region
      %s143 = ssub.s32 %s9, 1
      %s144 = smul.u32 32, %s14
      %p145 = scmp.lt.s32.totalorder %s144, 63
      %s146 = scalar_select %p145, %s144, 63
      %s147 = smul.addr %s146, 8
      %s148 = scalar_lea.vmem %s0, %s147
      %p149 = pneg %p35
      %p150 = pneg %p32
      %p151 = pneg %p56
      %p152 = pneg %p53
      %p153 = pneg %p77
      %p154 = pneg %p74
      %p155 = pneg %p103
      %p156 = pneg %p100
      %s157 = smul.u32 32, %s14
      %p158 = scmp.lt.s32.totalorder %s157, 63
      %s159 = scalar_select %p158, %s157, 63
      %s160 = smul.addr %s159, 8
      %s161 = scalar_lea.vmem %s3, %s160
      %s162 = smul.u32 32, %s14
      %p163 = scmp.lt.s32.totalorder %s162, 63
      %s164 = scalar_select %p163, %s162, 63
      %s165 = smul.addr %s164, 8
      %s166 = scalar_lea.vmem %s0, %s165
      %s167 = smul.u32 32, %s14
      %s168 = smul.u32 32, %s14
      %p169 = scmp.lt.s32.totalorder %s168, 63
      %s170 = scalar_select %p169, %s168, 63
      %s171 = smul.addr %s170, 8
      %s172 = scalar_lea.vmem %s3, %s171
      %s173 = smul.u32 32, %s14
      %v174 = vld [vmem:[%s166] sm:$0xff]
      %v175 = vld [vmem:[%s166 + $0x8] sm:$0xff]
      %v176 = vld [vmem:[%s166 + $0x10] sm:$0xff]
      %v177 = vld [vmem:[%s166 + $0x18] sm:$0xff]
      %v178 = vld [vmem:[%s166 + $0x20] sm:$0xff]
      %v179 = vld [vmem:[%s166 + $0x28] sm:$0xff]
      %v180 = vld [vmem:[%s166 + $0x30] sm:$0xff]
      %v181 = vld [vmem:[%s166 + $0x38] sm:$0xff]
      %v182 = vld [vmem:[%s166 + $0x40] sm:$0xff]
      %v183 = vld [vmem:[%s166 + $0x48] sm:$0xff]
      %v184 = vld [vmem:[%s166 + $0x50] sm:$0xff]
      %v185 = vld [vmem:[%s166 + $0x58] sm:$0xff]
      %v186 = vld [vmem:[%s166 + $0x60] sm:$0xff]
      %v187 = vld [vmem:[%s166 + $0x68] sm:$0xff]
      %v188 = vld [vmem:[%s166 + $0x70] sm:$0xff]
      %v189 = vld [vmem:[%s166 + $0x78] sm:$0xff]
      %v190 = vld [vmem:[%s166 + $0x80] sm:$0xff]
      %v191 = vld [vmem:[%s166 + $0x88] sm:$0xff]
      %v192 = vld [vmem:[%s166 + $0x90] sm:$0xff]
      %v193 = vld [vmem:[%s166 + $0x98] sm:$0xff]
      %v194 = vld [vmem:[%s166 + $0xa0] sm:$0xff]
      %v195 = vld [vmem:[%s166 + $0xa8] sm:$0xff]
      %v196 = vld [vmem:[%s166 + $0xb0] sm:$0xff]
      %v197 = vld [vmem:[%s166 + $0xb8] sm:$0xff]
      %v198 = vld [vmem:[%s166 + $0xc0] sm:$0xff]
      %v199 = vld [vmem:[%s166 + $0xc8] sm:$0xff]
      %v200 = vld [vmem:[%s166 + $0xd0] sm:$0xff]
      %v201 = vld [vmem:[%s166 + $0xd8] sm:$0xff]
      %v202 = vld [vmem:[%s166 + $0xe0] sm:$0xff]
      %v203 = vld [vmem:[%s166 + $0xe8] sm:$0xff]
      %v204 = vld [vmem:[%s166 + $0xf0] sm:$0xff]
      %v205 = vld [vmem:[%s166 + $0xf8] sm:$0xff]
      %v206 = vld [vmem:[%s1] sm:$0xf]
      %v207 = vld [vmem:[%s2] sm:$0x1]
      %v209 = vperm.slane %v207, 0
      %vm211 = vcmask 31744
      %v213 = vsel %vm211, %v174, 0
      %v216 = vsel %vm211, %v175, 0
      %v219 = vsel %vm211, %v176, 0
      %v222 = vsel %vm211, %v177, 0
      %v225 = vsel %vm211, %v178, 0
      %v228 = vsel %vm211, %v179, 0
      %v231 = vsel %vm211, %v180, 0
      %v234 = vsel %vm211, %v181, 0
      %v237 = vsel %vm211, %v182, 0
      %v240 = vsel %vm211, %v183, 0
      %v243 = vsel %vm211, %v184, 0
      %v246 = vsel %vm211, %v185, 0
      %v249 = vsel %vm211, %v186, 0
      %v252 = vsel %vm211, %v187, 0
      %v255 = vsel %vm211, %v188, 0
      %v258 = vsel %vm211, %v189, 0
      %v261 = vsel %vm211, %v190, 0
      %v264 = vsel %vm211, %v191, 0
      %v267 = vsel %vm211, %v192, 0
      %v270 = vsel %vm211, %v193, 0
      %v273 = vsel %vm211, %v194, 0
      %v276 = vsel %vm211, %v195, 0
      %v279 = vsel %vm211, %v196, 0
      %v282 = vsel %vm211, %v197, 0
      %v285 = vsel %vm211, %v198, 0
      %v288 = vsel %vm211, %v199, 0
      %v291 = vsel %vm211, %v200, 0
      %v294 = vsel %vm211, %v201, 0
      %v297 = vsel %vm211, %v202, 0
      %v300 = vsel %vm211, %v203, 0
      %v303 = vsel %vm211, %v204, 0
      %v306 = vsel %vm211, %v205, 0
      %vm308 = vcmask 1043456
      %v310 = vsel %vm308, %v206, 0
      %312 = vmatpush.msra.mxu0 0.0
      %313 = vmatpush.msra.mxu0 0.0
      %314 = vmatpush.msra.mxu0 0.0
      %315 = vmatpush.msra.mxu0 0.0
      %316 = vmatpush.msra.mxu0 0.0
      %317 = vmatpush.msra.mxu0 0.0
      %318 = vmatpush.msra.mxu0 0.0
      %319 = vmatpush.msra.mxu0 0.0
      %320 = vmatpush.msra.mxu0 0.0
      %321 = vmatpush.msra.mxu0 0.0
      %322 = vmatpush.msra.mxu0 0.0
      %323 = vmatpush.msra.mxu0 0.0
      %324 = vmatpush.msra.mxu0 0.0
      %325 = vmatpush.msra.mxu0 0.0
      %326 = vmatpush.msra.mxu0 0.0
      %327 = vmatpush.msra.mxu0 %v310
      %328 = vmatmul.f32.gmra.mxu0 %v213
      %v329 = vpop.f32.mrf.mxu0
      %v330 = vadd.f32 %v209, %v329
      %331 = vmatmul.f32.gmra.mxu0 %v216
      %v332 = vpop.f32.mrf.mxu0
      %v333 = vadd.f32 %v209, %v332
      %334 = vmatmul.f32.gmra.mxu0 %v219
      %v335 = vpop.f32.mrf.mxu0
      %v336 = vadd.f32 %v209, %v335
      %337 = vmatmul.f32.gmra.mxu0 %v222
      %v338 = vpop.f32.mrf.mxu0
      %v339 = vadd.f32 %v209, %v338
      %340 = vmatmul.f32.gmra.mxu0 %v225
      %v341 = vpop.f32.mrf.mxu0
      %v342 = vadd.f32 %v209, %v341
      %343 = vmatmul.f32.gmra.mxu0 %v228
      %v344 = vpop.f32.mrf.mxu0
      %v345 = vadd.f32 %v209, %v344
      %346 = vmatmul.f32.gmra.mxu0 %v231
      %v347 = vpop.f32.mrf.mxu0
      %v348 = vadd.f32 %v209, %v347
      %349 = vmatmul.f32.gmra.mxu0 %v234
      %v350 = vpop.f32.mrf.mxu0
      %v351 = vadd.f32 %v209, %v350
      %352 = vmatmul.f32.gmra.mxu0 %v237
      %v353 = vpop.f32.mrf.mxu0
      %v354 = vadd.f32 %v209, %v353
      %355 = vmatmul.f32.gmra.mxu0 %v240
      %v356 = vpop.f32.mrf.mxu0
      %v357 = vadd.f32 %v209, %v356
      %358 = vmatmul.f32.gmra.mxu0 %v243
      %v359 = vpop.f32.mrf.mxu0
      %v360 = vadd.f32 %v209, %v359
      %361 = vmatmul.f32.gmra.mxu0 %v246
      %v362 = vpop.f32.mrf.mxu0
      %v363 = vadd.f32 %v209, %v362
      %364 = vmatmul.f32.gmra.mxu0 %v249
      %v365 = vpop.f32.mrf.mxu0
      %v366 = vadd.f32 %v209, %v365
      %367 = vmatmul.f32.gmra.mxu0 %v252
      %v368 = vpop.f32.mrf.mxu0
      %v369 = vadd.f32 %v209, %v368
      %370 = vmatmul.f32.gmra.mxu0 %v255
      %v371 = vpop.f32.mrf.mxu0
      %v372 = vadd.f32 %v209, %v371
      %373 = vmatmul.f32.gmra.mxu0 %v258
      %v374 = vpop.f32.mrf.mxu0
      %v375 = vadd.f32 %v209, %v374
      %376 = vmatmul.f32.gmra.mxu0 %v261
      %v377 = vpop.f32.mrf.mxu0
      %v378 = vadd.f32 %v209, %v377
      %379 = vmatmul.f32.gmra.mxu0 %v264
      %v380 = vpop.f32.mrf.mxu0
      %v381 = vadd.f32 %v209, %v380
      %382 = vmatmul.f32.gmra.mxu0 %v267
      %v383 = vpop.f32.mrf.mxu0
      %v384 = vadd.f32 %v209, %v383
      %385 = vmatmul.f32.gmra.mxu0 %v270
      %v386 = vpop.f32.mrf.mxu0
      %v387 = vadd.f32 %v209, %v386
      %388 = vmatmul.f32.gmra.mxu0 %v273
      %v389 = vpop.f32.mrf.mxu0
      %v390 = vadd.f32 %v209, %v389
      %391 = vmatmul.f32.gmra.mxu0 %v276
      %v392 = vpop.f32.mrf.mxu0
      %v393 = vadd.f32 %v209, %v392
      %394 = vmatmul.f32.gmra.mxu0 %v279
      %v395 = vpop.f32.mrf.mxu0
      %v396 = vadd.f32 %v209, %v395
      %397 = vmatmul.f32.gmra.mxu0 %v282
      %v398 = vpop.f32.mrf.mxu0
      %v399 = vadd.f32 %v209, %v398
      %400 = vmatmul.f32.gmra.mxu0 %v285
      %v401 = vpop.f32.mrf.mxu0
      %v402 = vadd.f32 %v209, %v401
      %403 = vmatmul.f32.gmra.mxu0 %v288
      %v404 = vpop.f32.mrf.mxu0
      %v405 = vadd.f32 %v209, %v404
      %406 = vmatmul.f32.gmra.mxu0 %v291
      %v407 = vpop.f32.mrf.mxu0
      %v408 = vadd.f32 %v209, %v407
      %409 = vmatmul.f32.gmra.mxu0 %v294
      %v410 = vpop.f32.mrf.mxu0
      %v411 = vadd.f32 %v209, %v410
      %412 = vmatmul.f32.gmra.mxu0 %v297
      %v413 = vpop.f32.mrf.mxu0
      %v414 = vadd.f32 %v209, %v413
      %415 = vmatmul.f32.gmra.mxu0 %v300
      %v416 = vpop.f32.mrf.mxu0
      %v417 = vadd.f32 %v209, %v416
      %418 = vmatmul.f32.gmra.mxu0 %v303
      %v419 = vpop.f32.mrf.mxu0
      %v420 = vadd.f32 %v209, %v419
      %421 = vmatmul.f32.gmra.mxu0 %v306
      %v422 = vpop.f32.mrf.mxu0
      %v423 = vadd.f32 %v209, %v422
      %424 = vdwg.mxu0
      %v425 = vmax.f32 %v330, 0.0
      %v426 = vmax.f32 %v333, 0.0
      %v427 = vmax.f32 %v336, 0.0
      %v428 = vmax.f32 %v339, 0.0
      %v429 = vmax.f32 %v342, 0.0
      %v430 = vmax.f32 %v345, 0.0
      %v431 = vmax.f32 %v348, 0.0
      %v432 = vmax.f32 %v351, 0.0
      %v433 = vmax.f32 %v354, 0.0
      %v434 = vmax.f32 %v357, 0.0
      %v435 = vmax.f32 %v360, 0.0
      %v436 = vmax.f32 %v363, 0.0
      %v437 = vmax.f32 %v366, 0.0
      %v438 = vmax.f32 %v369, 0.0
      %v439 = vmax.f32 %v372, 0.0
      %v440 = vmax.f32 %v375, 0.0
      %v441 = vmax.f32 %v378, 0.0
      %v442 = vmax.f32 %v381, 0.0
      %v443 = vmax.f32 %v384, 0.0
      %v444 = vmax.f32 %v387, 0.0
      %v445 = vmax.f32 %v390, 0.0
      %v446 = vmax.f32 %v393, 0.0
      %v447 = vmax.f32 %v396, 0.0
      %v448 = vmax.f32 %v399, 0.0
      %v449 = vmax.f32 %v402, 0.0
      %v450 = vmax.f32 %v405, 0.0
      %v451 = vmax.f32 %v408, 0.0
      %v452 = vmax.f32 %v411, 0.0
      %v453 = vmax.f32 %v414, 0.0
      %v454 = vmax.f32 %v417, 0.0
      %v455 = vmax.f32 %v420, 0.0
      %v456 = vmax.f32 %v423, 0.0
      %vm457 = vcmask 64512
      %458 = vst.msk [vmem:[%s172] sm:$0xff] %vm457, %v425
      %459 = vst.msk [vmem:[%s172 + $0x8] sm:$0xff] %vm457, %v426
      %460 = vst.msk [vmem:[%s172 + $0x10] sm:$0xff] %vm457, %v427
      %461 = vst.msk [vmem:[%s172 + $0x18] sm:$0xff] %vm457, %v428
      %462 = vst.msk [vmem:[%s172 + $0x20] sm:$0xff] %vm457, %v429
      %463 = vst.msk [vmem:[%s172 + $0x28] sm:$0xff] %vm457, %v430
      %464 = vst.msk [vmem:[%s172 + $0x30] sm:$0xff] %vm457, %v431
      %465 = vst.msk [vmem:[%s172 + $0x38] sm:$0xff] %vm457, %v432
      %466 = vst.msk [vmem:[%s172 + $0x40] sm:$0xff] %vm457, %v433
      %467 = vst.msk [vmem:[%s172 + $0x48] sm:$0xff] %vm457, %v434
      %468 = vst.msk [vmem:[%s172 + $0x50] sm:$0xff] %vm457, %v435
      %469 = vst.msk [vmem:[%s172 + $0x58] sm:$0xff] %vm457, %v436
      %470 = vst.msk [vmem:[%s172 + $0x60] sm:$0xff] %vm457, %v437
      %471 = vst.msk [vmem:[%s172 + $0x68] sm:$0xff] %vm457, %v438
      %472 = vst.msk [vmem:[%s172 + $0x70] sm:$0xff] %vm457, %v439
      %473 = vst.msk [vmem:[%s172 + $0x78] sm:$0xff] %vm457, %v440
      %474 = vst.msk [vmem:[%s172 + $0x80] sm:$0xff] %vm457, %v441
      %475 = vst.msk [vmem:[%s172 + $0x88] sm:$0xff] %vm457, %v442
      %476 = vst.msk [vmem:[%s172 + $0x90] sm:$0xff] %vm457, %v443
      %477 = vst.msk [vmem:[%s172 + $0x98] sm:$0xff] %vm457, %v444
      %478 = vst.msk [vmem:[%s172 + $0xa0] sm:$0xff] %vm457, %v445
      %479 = vst.msk [vmem:[%s172 + $0xa8] sm:$0xff] %vm457, %v446
      %480 = vst.msk [vmem:[%s172 + $0xb0] sm:$0xff] %vm457, %v447
      %481 = vst.msk [vmem:[%s172 + $0xb8] sm:$0xff] %vm457, %v448
      %482 = vst.msk [vmem:[%s172 + $0xc0] sm:$0xff] %vm457, %v449
      %483 = vst.msk [vmem:[%s172 + $0xc8] sm:$0xff] %vm457, %v450
      %484 = vst.msk [vmem:[%s172 + $0xd0] sm:$0xff] %vm457, %v451
      %485 = vst.msk [vmem:[%s172 + $0xd8] sm:$0xff] %vm457, %v452
      %486 = vst.msk [vmem:[%s172 + $0xe0] sm:$0xff] %vm457, %v453
      %487 = vst.msk [vmem:[%s172 + $0xe8] sm:$0xff] %vm457, %v454
      %488 = vst.msk [vmem:[%s172 + $0xf0] sm:$0xff] %vm457, %v455
      %489 = vst.msk [vmem:[%s172 + $0xf8] sm:$0xff] %vm457, %v456
      %s490 = smul.u32 32, %s14
      %p491 = scmp.lt.s32.totalorder %s490, 63
      %s492 = scalar_select %p491, %s490, 63
      %s493 = smul.addr %s492, 8
      %s494 = scalar_lea.vmem %s3, %s493
      // Predicated region
      $region33: #{sstkad_forward.4} parent=31 // pred_check
        %p495 = pneg %p100
      $region34: #{sstkad_forward.4} parent=31 // pred_check_branch
        %497 = sbr.rel (%p495) target = $region36
      $region35: #{sstkad_forward.4} parent=31 // pred_region
        %s498 = smul.u32 32, %s14
      $region36: #{sstkad_forward.4} parent=31 // pred_fallthru
        _
    $region32: #{sstkad_forward.4} parent=5 // pred_fallthru
      _
    %p499 = scmp.le.s32.totalorder 2, %s9
    // Predicated region
    $region37: #{sstkad_forward.4} parent=5 // pred_check
      %p500 = pneg %p499
    $region38: #{sstkad_forward.4} parent=5 // pred_check_branch
      %502 = sbr.rel (%p500) target = $region40
    $region39: #{sstkad_forward.4} parent=5 // pred_region
      %s503 = ssub.s32 %s9, 2
      // Predicated region
      $region41: #{sstkad_forward.4} parent=39 // pred_check
        %p504 = pneg %p106
      $region42: #{sstkad_forward.4} parent=39 // pred_check_branch
        %506 = sbr.rel (%p504) target = $region44
      $region43: #{sstkad_forward.4} parent=39 // pred_region
        %s507 = smul.u32 32, %s15
        %p508 = scmp.lt.s32.totalorder %s507, 63
        %s509 = scalar_select %p508, %s507, 63
        %s510 = smul.addr %s509, 8
        %s511 = scalar_lea.vmem %s3, %s510
      $region44: #{sstkad_forward.4} parent=39 // pred_fallthru
        _
    $region40: #{sstkad_forward.4} parent=5 // pred_fallthru
      _
  $region6: #{sstkad_forward.4} parent=0 // loop_footer
    %s13 = sadd.s32 1, %s9
  $region7: #{sstkad_forward.4} parent=0 // loop_footer_branch
    %8 = sbr.rel target = $region3
  $region8: #{sstkad_forward.4} parent=0 // loop_exit
    _

// kernel: sstkad_forward.5
$region0: #{sstkad_forward.5}
  #allocation0 [shape = 'u32[]', space=smem, size = 0x4, offset = 0x4, fixed_abs, tag = 'smem constant byte address 0x4 - core index']
  #allocation1 [shape = 'u32[72,128]{1,0:T(1,128)}', space=vmem, size = 0x9000, scoped, tag = 'internal scratch']
  %s0 = inlined_call_operand.vmem [shape: f32[512,8], index: 0, kind: input, shape index: {}]
  %s1 = inlined_call_operand.vmem [shape: f32[8,80], index: 1, kind: input, shape index: {}]
  %s2 = inlined_call_operand.vmem [shape: f32[1,80], index: 2, kind: input, shape index: {}]
  %s3 = inlined_call_operand.vmem [shape: f32[512,80], index: 3, kind: output, shape index: {}]
  %s4 = sld [smem:[#allocation0]]
  $region45: #{sstkad_forward.5} parent=0
    _
  %s6 = ssub.s32 1, %s4
  %s7 = scalar_select 0, %s6, %s4
  loop: start=0, step=1, limit=4
  $region2: #{sstkad_forward.5} parent=0 // loop_pre_header
    _
  $region3: #{sstkad_forward.5} parent=0 // loop_header
    %s9 = sphi 0, %s13
    %p10 = scmp.ge.s32.totalorder %s9, 4
    %s19 = sphi 0, %s21
    %s22 = sphi 0, %s19
    %s23 = sphi 0, %s22
    %s39 = sphi 0, %s23
    %s43 = sphi 0, %s43
    %s45 = sphi 0, %s43
    %s46 = sphi 0, %s45
    %s60 = sphi 0, %s46
    %s64 = sphi 0, %s64
    %s66 = sphi 0, %s64
    %s67 = sphi 0, %s66
    %s81 = sphi 0, %s67
    %s87 = sphi 0, %s89
    %s90 = sphi 0, %s87
    %s91 = sphi 0, %s90
    %s107 = sphi 0, %s91
  $region4: #{sstkad_forward.5} parent=0 // loop_header_branch
    %12 = sbr.rel (%p10) target = $region8
  $region5: #{sstkad_forward.5} parent=0 // loop_body
    %s14 = ssub.s32 %s9, 1
    %s15 = ssub.s32 %s9, 2
    %s16 = sadd.s32 %s9, 1
    %s17 = ssub.s32 %s9, %s16
    %p18 = scmp.eq.s32.totalorder %s17, 0
    %s20 = sadd.s32 %s19, 1
    %s21 = scalar_select %p18, %s19, %s20
    %p24 = pneg %p18
    %p25 = scmp.eq.s32.totalorder %s9, 1
    %p26 = por %p24, %p25
    %p27 = scmp.ne.s32.totalorder %s19, %s22
    %p28 = scmp.eq.s32.totalorder %s9, 0
    %p29 = por %p27, %p28
    %p30 = scmp.ne.s32.totalorder %s19, %s22
    %p31 = scmp.eq.s32.totalorder %s14, 1
    %p32 = por %p30, %p31
    %p33 = scmp.ne.s32.totalorder %s22, %s23
    %p34 = scmp.eq.s32.totalorder %s14, 0
    %p35 = por %p33, %p34
    %p36 = scmp.ne.s32.totalorder %s22, %s23
    %p37 = scmp.eq.s32.totalorder %s15, 1
    %p38 = por %p36, %p37
    %p40 = scmp.ne.s32.totalorder %s23, %s39
    %p41 = scmp.eq.s32.totalorder %s15, 0
    %p42 = por %p40, %p41
    %s44 = sadd.s32 %s43, 1
    %p47 = scmp.eq.s32.totalorder %s9, 1
    %p48 = scmp.ne.s32.totalorder %s43, %s45
    %p49 = scmp.eq.s32.totalorder %s9, 0
    %p50 = por %p48, %p49
    %p51 = scmp.ne.s32.totalorder %s43, %s45
    %p52 = scmp.eq.s32.totalorder %s14, 1
    %p53 = por %p51, %p52
    %p54 = scmp.ne.s32.totalorder %s45, %s46
    %p55 = scmp.eq.s32.totalorder %s14, 0
    %p56 = por %p54, %p55
    %p57 = scmp.ne.s32.totalorder %s45, %s46
    %p58 = scmp.eq.s32.totalorder %s15, 1
    %p59 = por %p57, %p58
    %p61 = scmp.ne.s32.totalorder %s46, %s60
    %p62 = scmp.eq.s32.totalorder %s15, 0
    %p63 = por %p61, %p62
    %s65 = sadd.s32 %s64, 1
    %p68 = scmp.eq.s32.totalorder %s9, 1
    %p69 = scmp.ne.s32.totalorder %s64, %s66
    %p70 = scmp.eq.s32.totalorder %s9, 0
    %p71 = por %p69, %p70
    %p72 = scmp.ne.s32.totalorder %s64, %s66
    %p73 = scmp.eq.s32.totalorder %s14, 1
    %p74 = por %p72, %p73
    %p75 = scmp.ne.s32.totalorder %s66, %s67
    %p76 = scmp.eq.s32.totalorder %s14, 0
    %p77 = por %p75, %p76
    %p78 = scmp.ne.s32.totalorder %s66, %s67
    %p79 = scmp.eq.s32.totalorder %s15, 1
    %p80 = por %p78, %p79
    %p82 = scmp.ne.s32.totalorder %s67, %s81
    %p83 = scmp.eq.s32.totalorder %s15, 0
    %p84 = por %p82, %p83
    %s85 = ssub.s32 %s9, %s16
    %p86 = scmp.eq.s32.totalorder %s85, 0
    %s88 = sadd.s32 %s87, 1
    %s89 = scalar_select %p86, %s87, %s88
    %p92 = pneg %p86
    %p93 = scmp.eq.s32.totalorder %s9, 1
    %p94 = por %p92, %p93
    %p95 = scmp.ne.s32.totalorder %s87, %s90
    %p96 = scmp.eq.s32.totalorder %s9, 0
    %p97 = por %p95, %p96
    %p98 = scmp.ne.s32.totalorder %s87, %s90
    %p99 = scmp.eq.s32.totalorder %s14, 1
    %p100 = por %p98, %p99
    %p101 = scmp.ne.s32.totalorder %s90, %s91
    %p102 = scmp.eq.s32.totalorder %s14, 0
    %p103 = por %p101, %p102
    %p104 = scmp.ne.s32.totalorder %s90, %s91
    %p105 = scmp.eq.s32.totalorder %s15, 1
    %p106 = por %p104, %p105
    %p108 = scmp.ne.s32.totalorder %s91, %s107
    %p109 = scmp.eq.s32.totalorder %s15, 0
    %p110 = por %p108, %p109
    %p111 = scmp.le.s32.totalorder 1, %s9
    %p112 = scmp.lt.s32.totalorder %s9, 3
    %p113 = pnand %p111, %p112
    %p114 = pneg %p113
    // Predicated region
    $region9: #{sstkad_forward.5} parent=5 // pred_check
      _
    $region10: #{sstkad_forward.5} parent=5 // pred_check_branch
      %116 = sbr.rel (%p113) target = $region12
    $region11: #{sstkad_forward.5} parent=5 // pred_region
      %s117 = ssub.s32 %s9, 1
      // Predicated region
      $region13: #{sstkad_forward.5} parent=11 // pred_check
        %p118 = pneg %p56
      $region14: #{sstkad_forward.5} parent=11 // pred_check_branch
        %120 = sbr.rel (%p118) target = $region16
      $region15: #{sstkad_forward.5} parent=11 // pred_region
        _
      $region16: #{sstkad_forward.5} parent=11 // pred_fallthru
        _
      // Predicated region
      $region17: #{sstkad_forward.5} parent=11 // pred_check
        %p121 = pneg %p77
      $region18: #{sstkad_forward.5} parent=11 // pred_check_branch
        %123 = sbr.rel (%p121) target = $region20
      $region19: #{sstkad_forward.5} parent=11 // pred_region
        _
      $region20: #{sstkad_forward.5} parent=11 // pred_fallthru
        _
    $region12: #{sstkad_forward.5} parent=5 // pred_fallthru
      _
    %p124 = scmp.lt.s32.totalorder %s9, 2
    // Predicated region
    $region21: #{sstkad_forward.5} parent=5 // pred_check
      %p125 = pneg %p124
    $region22: #{sstkad_forward.5} parent=5 // pred_check_branch
      %127 = sbr.rel (%p125) target = $region24
    $region23: #{sstkad_forward.5} parent=5 // pred_region
      // Predicated region
      $region25: #{sstkad_forward.5} parent=23 // pred_check
        %p128 = pneg %p29
      $region26: #{sstkad_forward.5} parent=23 // pred_check_branch
        %130 = sbr.rel (%p128) target = $region28
      $region27: #{sstkad_forward.5} parent=23 // pred_region
        %s131 = smul.u32 32, %s9
        %p132 = scmp.lt.s32.totalorder %s131, 63
        %s133 = scalar_select %p132, %s131, 63
        %s134 = smul.addr %s133, 8
        %s135 = scalar_lea.vmem %s0, %s134
        %s136 = smul.u32 32, %s9
      $region28: #{sstkad_forward.5} parent=23 // pred_fallthru
        _
    $region24: #{sstkad_forward.5} parent=5 // pred_fallthru
      _
    %p137 = scmp.le.s32.totalorder 1, %s9
    %p138 = scmp.lt.s32.totalorder %s9, 3
    %p139 = pnand %p137, %p138
    %p140 = pneg %p139
    // Predicated region
    $region29: #{sstkad_forward.5} parent=5 // pred_check
      _
    $region30: #{sstkad_forward.5} parent=5 // pred_check_branch
      %142 = sbr.rel (%p139) target = $region32
    $region31: #{sstkad_forward.5} parent=5 // pred_region
      %s143 = ssub.s32 %s9, 1
      %s144 = smul.u32 32, %s14
      %p145 = scmp.lt.s32.totalorder %s144, 63
      %s146 = scalar_select %p145, %s144, 63
      %s147 = smul.addr %s146, 8
      %s148 = scalar_lea.vmem %s0, %s147
      %p149 = pneg %p35
      %p150 = pneg %p32
      %p151 = pneg %p56
      %p152 = pneg %p53
      %p153 = pneg %p77
      %p154 = pneg %p74
      %p155 = pneg %p103
      %p156 = pneg %p100
      %s157 = smul.u32 32, %s14
      %p158 = scmp.lt.s32.totalorder %s157, 63
      %s159 = scalar_select %p158, %s157, 63
      %s160 = smul.addr %s159, 8
      %s161 = scalar_lea.vmem %s3, %s160
      %s162 = smul.u32 32, %s14
      %p163 = scmp.lt.s32.totalorder %s162, 63
      %s164 = scalar_select %p163, %s162, 63
      %s165 = smul.addr %s164, 8
      %s166 = scalar_lea.vmem %s0, %s165
      %s167 = smul.u32 32, %s14
      %s168 = smul.u32 32, %s14
      %p169 = scmp.lt.s32.totalorder %s168, 63
      %s170 = scalar_select %p169, %s168, 63
      %s171 = smul.addr %s170, 8
      %s172 = scalar_lea.vmem %s3, %s171
      %s173 = smul.u32 32, %s14
      %v174 = vld [vmem:[%s166] sm:$0xff]
      %v175 = vld [vmem:[%s166 + $0x8] sm:$0xff]
      %v176 = vld [vmem:[%s166 + $0x10] sm:$0xff]
      %v177 = vld [vmem:[%s166 + $0x18] sm:$0xff]
      %v178 = vld [vmem:[%s166 + $0x20] sm:$0xff]
      %v179 = vld [vmem:[%s166 + $0x28] sm:$0xff]
      %v180 = vld [vmem:[%s166 + $0x30] sm:$0xff]
      %v181 = vld [vmem:[%s166 + $0x38] sm:$0xff]
      %v182 = vld [vmem:[%s166 + $0x40] sm:$0xff]
      %v183 = vld [vmem:[%s166 + $0x48] sm:$0xff]
      %v184 = vld [vmem:[%s166 + $0x50] sm:$0xff]
      %v185 = vld [vmem:[%s166 + $0x58] sm:$0xff]
      %v186 = vld [vmem:[%s166 + $0x60] sm:$0xff]
      %v187 = vld [vmem:[%s166 + $0x68] sm:$0xff]
      %v188 = vld [vmem:[%s166 + $0x70] sm:$0xff]
      %v189 = vld [vmem:[%s166 + $0x78] sm:$0xff]
      %v190 = vld [vmem:[%s166 + $0x80] sm:$0xff]
      %v191 = vld [vmem:[%s166 + $0x88] sm:$0xff]
      %v192 = vld [vmem:[%s166 + $0x90] sm:$0xff]
      %v193 = vld [vmem:[%s166 + $0x98] sm:$0xff]
      %v194 = vld [vmem:[%s166 + $0xa0] sm:$0xff]
      %v195 = vld [vmem:[%s166 + $0xa8] sm:$0xff]
      %v196 = vld [vmem:[%s166 + $0xb0] sm:$0xff]
      %v197 = vld [vmem:[%s166 + $0xb8] sm:$0xff]
      %v198 = vld [vmem:[%s166 + $0xc0] sm:$0xff]
      %v199 = vld [vmem:[%s166 + $0xc8] sm:$0xff]
      %v200 = vld [vmem:[%s166 + $0xd0] sm:$0xff]
      %v201 = vld [vmem:[%s166 + $0xd8] sm:$0xff]
      %v202 = vld [vmem:[%s166 + $0xe0] sm:$0xff]
      %v203 = vld [vmem:[%s166 + $0xe8] sm:$0xff]
      %v204 = vld [vmem:[%s166 + $0xf0] sm:$0xff]
      %v205 = vld [vmem:[%s166 + $0xf8] sm:$0xff]
      %v206 = vld [vmem:[%s1] sm:$0xff]
      %v207 = vld [vmem:[%s2] sm:$0x1]
      %v209 = vperm.slane %v207, 0
      %vm211 = vcmask 64512
      %v213 = vsel %vm211, %v174, 0
      %v216 = vsel %vm211, %v175, 0
      %v219 = vsel %vm211, %v176, 0
      %v222 = vsel %vm211, %v177, 0
      %v225 = vsel %vm211, %v178, 0
      %v228 = vsel %vm211, %v179, 0
      %v231 = vsel %vm211, %v180, 0
      %v234 = vsel %vm211, %v181, 0
      %v237 = vsel %vm211, %v182, 0
      %v240 = vsel %vm211, %v183, 0
      %v243 = vsel %vm211, %v184, 0
      %v246 = vsel %vm211, %v185, 0
      %v249 = vsel %vm211, %v186, 0
      %v252 = vsel %vm211, %v187, 0
      %v255 = vsel %vm211, %v188, 0
      %v258 = vsel %vm211, %v189, 0
      %v261 = vsel %vm211, %v190, 0
      %v264 = vsel %vm211, %v191, 0
      %v267 = vsel %vm211, %v192, 0
      %v270 = vsel %vm211, %v193, 0
      %v273 = vsel %vm211, %v194, 0
      %v276 = vsel %vm211, %v195, 0
      %v279 = vsel %vm211, %v196, 0
      %v282 = vsel %vm211, %v197, 0
      %v285 = vsel %vm211, %v198, 0
      %v288 = vsel %vm211, %v199, 0
      %v291 = vsel %vm211, %v200, 0
      %v294 = vsel %vm211, %v201, 0
      %v297 = vsel %vm211, %v202, 0
      %v300 = vsel %vm211, %v203, 0
      %v303 = vsel %vm211, %v204, 0
      %v306 = vsel %vm211, %v205, 0
      %308 = vmatpush.msra.mxu0 0.0
      %309 = vmatpush.msra.mxu0 0.0
      %310 = vmatpush.msra.mxu0 0.0
      %311 = vmatpush.msra.mxu0 0.0
      %312 = vmatpush.msra.mxu0 0.0
      %313 = vmatpush.msra.mxu0 0.0
      %314 = vmatpush.msra.mxu0 0.0
      %315 = vmatpush.msra.mxu0 0.0
      %316 = vmatpush.msra.mxu0 0.0
      %317 = vmatpush.msra.mxu0 0.0
      %318 = vmatpush.msra.mxu0 0.0
      %319 = vmatpush.msra.mxu0 0.0
      %320 = vmatpush.msra.mxu0 0.0
      %321 = vmatpush.msra.mxu0 0.0
      %322 = vmatpush.msra.mxu0 0.0
      %323 = vmatpush.msra.mxu0 %v206
      %324 = vmatmul.f32.gmra.mxu0 %v213
      %v325 = vpop.f32.mrf.mxu0
      %v326 = vadd.f32 %v209, %v325
      %327 = vmatmul.f32.gmra.mxu0 %v216
      %v328 = vpop.f32.mrf.mxu0
      %v329 = vadd.f32 %v209, %v328
      %330 = vmatmul.f32.gmra.mxu0 %v219
      %v331 = vpop.f32.mrf.mxu0
      %v332 = vadd.f32 %v209, %v331
      %333 = vmatmul.f32.gmra.mxu0 %v222
      %v334 = vpop.f32.mrf.mxu0
      %v335 = vadd.f32 %v209, %v334
      %336 = vmatmul.f32.gmra.mxu0 %v225
      %v337 = vpop.f32.mrf.mxu0
      %v338 = vadd.f32 %v209, %v337
      %339 = vmatmul.f32.gmra.mxu0 %v228
      %v340 = vpop.f32.mrf.mxu0
      %v341 = vadd.f32 %v209, %v340
      %342 = vmatmul.f32.gmra.mxu0 %v231
      %v343 = vpop.f32.mrf.mxu0
      %v344 = vadd.f32 %v209, %v343
      %345 = vmatmul.f32.gmra.mxu0 %v234
      %v346 = vpop.f32.mrf.mxu0
      %v347 = vadd.f32 %v209, %v346
      %348 = vmatmul.f32.gmra.mxu0 %v237
      %v349 = vpop.f32.mrf.mxu0
      %v350 = vadd.f32 %v209, %v349
      %351 = vmatmul.f32.gmra.mxu0 %v240
      %v352 = vpop.f32.mrf.mxu0
      %v353 = vadd.f32 %v209, %v352
      %354 = vmatmul.f32.gmra.mxu0 %v243
      %v355 = vpop.f32.mrf.mxu0
      %v356 = vadd.f32 %v209, %v355
      %357 = vmatmul.f32.gmra.mxu0 %v246
      %v358 = vpop.f32.mrf.mxu0
      %v359 = vadd.f32 %v209, %v358
      %360 = vmatmul.f32.gmra.mxu0 %v249
      %v361 = vpop.f32.mrf.mxu0
      %v362 = vadd.f32 %v209, %v361
      %363 = vmatmul.f32.gmra.mxu0 %v252
      %v364 = vpop.f32.mrf.mxu0
      %v365 = vadd.f32 %v209, %v364
      %366 = vmatmul.f32.gmra.mxu0 %v255
      %v367 = vpop.f32.mrf.mxu0
      %v368 = vadd.f32 %v209, %v367
      %369 = vmatmul.f32.gmra.mxu0 %v258
      %v370 = vpop.f32.mrf.mxu0
      %v371 = vadd.f32 %v209, %v370
      %372 = vmatmul.f32.gmra.mxu0 %v261
      %v373 = vpop.f32.mrf.mxu0
      %v374 = vadd.f32 %v209, %v373
      %375 = vmatmul.f32.gmra.mxu0 %v264
      %v376 = vpop.f32.mrf.mxu0
      %v377 = vadd.f32 %v209, %v376
      %378 = vmatmul.f32.gmra.mxu0 %v267
      %v379 = vpop.f32.mrf.mxu0
      %v380 = vadd.f32 %v209, %v379
      %381 = vmatmul.f32.gmra.mxu0 %v270
      %v382 = vpop.f32.mrf.mxu0
      %v383 = vadd.f32 %v209, %v382
      %384 = vmatmul.f32.gmra.mxu0 %v273
      %v385 = vpop.f32.mrf.mxu0
      %v386 = vadd.f32 %v209, %v385
      %387 = vmatmul.f32.gmra.mxu0 %v276
      %v388 = vpop.f32.mrf.mxu0
      %v389 = vadd.f32 %v209, %v388
      %390 = vmatmul.f32.gmra.mxu0 %v279
      %v391 = vpop.f32.mrf.mxu0
      %v392 = vadd.f32 %v209, %v391
      %393 = vmatmul.f32.gmra.mxu0 %v282
      %v394 = vpop.f32.mrf.mxu0
      %v395 = vadd.f32 %v209, %v394
      %396 = vmatmul.f32.gmra.mxu0 %v285
      %v397 = vpop.f32.mrf.mxu0
      %v398 = vadd.f32 %v209, %v397
      %399 = vmatmul.f32.gmra.mxu0 %v288
      %v400 = vpop.f32.mrf.mxu0
      %v401 = vadd.f32 %v209, %v400
      %402 = vmatmul.f32.gmra.mxu0 %v291
      %v403 = vpop.f32.mrf.mxu0
      %v404 = vadd.f32 %v209, %v403
      %405 = vmatmul.f32.gmra.mxu0 %v294
      %v406 = vpop.f32.mrf.mxu0
      %v407 = vadd.f32 %v209, %v406
      %408 = vmatmul.f32.gmra.mxu0 %v297
      %v409 = vpop.f32.mrf.mxu0
      %v410 = vadd.f32 %v209, %v409
      %411 = vmatmul.f32.gmra.mxu0 %v300
      %v412 = vpop.f32.mrf.mxu0
      %v413 = vadd.f32 %v209, %v412
      %414 = vmatmul.f32.gmra.mxu0 %v303
      %v415 = vpop.f32.mrf.mxu0
      %v416 = vadd.f32 %v209, %v415
      %417 = vmatmul.f32.gmra.mxu0 %v306
      %v418 = vpop.f32.mrf.mxu0
      %v419 = vadd.f32 %v209, %v418
      %420 = vdwg.mxu0
      %v421 = vmax.f32 %v326, 0.0
      %v422 = vmax.f32 %v329, 0.0
      %v423 = vmax.f32 %v332, 0.0
      %v424 = vmax.f32 %v335, 0.0
      %v425 = vmax.f32 %v338, 0.0
      %v426 = vmax.f32 %v341, 0.0
      %v427 = vmax.f32 %v344, 0.0
      %v428 = vmax.f32 %v347, 0.0
      %v429 = vmax.f32 %v350, 0.0
      %v430 = vmax.f32 %v353, 0.0
      %v431 = vmax.f32 %v356, 0.0
      %v432 = vmax.f32 %v359, 0.0
      %v433 = vmax.f32 %v362, 0.0
      %v434 = vmax.f32 %v365, 0.0
      %v435 = vmax.f32 %v368, 0.0
      %v436 = vmax.f32 %v371, 0.0
      %v437 = vmax.f32 %v374, 0.0
      %v438 = vmax.f32 %v377, 0.0
      %v439 = vmax.f32 %v380, 0.0
      %v440 = vmax.f32 %v383, 0.0
      %v441 = vmax.f32 %v386, 0.0
      %v442 = vmax.f32 %v389, 0.0
      %v443 = vmax.f32 %v392, 0.0
      %v444 = vmax.f32 %v395, 0.0
      %v445 = vmax.f32 %v398, 0.0
      %v446 = vmax.f32 %v401, 0.0
      %v447 = vmax.f32 %v404, 0.0
      %v448 = vmax.f32 %v407, 0.0
      %v449 = vmax.f32 %v410, 0.0
      %v450 = vmax.f32 %v413, 0.0
      %v451 = vmax.f32 %v416, 0.0
      %v452 = vmax.f32 %v419, 0.0
      %vm453 = vcmask 654336
      %454 = vst.msk [vmem:[%s172] sm:$0xff] %vm453, %v421
      %455 = vst.msk [vmem:[%s172 + $0x8] sm:$0xff] %vm453, %v422
      %456 = vst.msk [vmem:[%s172 + $0x10] sm:$0xff] %vm453, %v423
      %457 = vst.msk [vmem:[%s172 + $0x18] sm:$0xff] %vm453, %v424
      %458 = vst.msk [vmem:[%s172 + $0x20] sm:$0xff] %vm453, %v425
      %459 = vst.msk [vmem:[%s172 + $0x28] sm:$0xff] %vm453, %v426
      %460 = vst.msk [vmem:[%s172 + $0x30] sm:$0xff] %vm453, %v427
      %461 = vst.msk [vmem:[%s172 + $0x38] sm:$0xff] %vm453, %v428
      %462 = vst.msk [vmem:[%s172 + $0x40] sm:$0xff] %vm453, %v429
      %463 = vst.msk [vmem:[%s172 + $0x48] sm:$0xff] %vm453, %v430
      %464 = vst.msk [vmem:[%s172 + $0x50] sm:$0xff] %vm453, %v431
      %465 = vst.msk [vmem:[%s172 + $0x58] sm:$0xff] %vm453, %v432
      %466 = vst.msk [vmem:[%s172 + $0x60] sm:$0xff] %vm453, %v433
      %467 = vst.msk [vmem:[%s172 + $0x68] sm:$0xff] %vm453, %v434
      %468 = vst.msk [vmem:[%s172 + $0x70] sm:$0xff] %vm453, %v435
      %469 = vst.msk [vmem:[%s172 + $0x78] sm:$0xff] %vm453, %v436
      %470 = vst.msk [vmem:[%s172 + $0x80] sm:$0xff] %vm453, %v437
      %471 = vst.msk [vmem:[%s172 + $0x88] sm:$0xff] %vm453, %v438
      %472 = vst.msk [vmem:[%s172 + $0x90] sm:$0xff] %vm453, %v439
      %473 = vst.msk [vmem:[%s172 + $0x98] sm:$0xff] %vm453, %v440
      %474 = vst.msk [vmem:[%s172 + $0xa0] sm:$0xff] %vm453, %v441
      %475 = vst.msk [vmem:[%s172 + $0xa8] sm:$0xff] %vm453, %v442
      %476 = vst.msk [vmem:[%s172 + $0xb0] sm:$0xff] %vm453, %v443
      %477 = vst.msk [vmem:[%s172 + $0xb8] sm:$0xff] %vm453, %v444
      %478 = vst.msk [vmem:[%s172 + $0xc0] sm:$0xff] %vm453, %v445
      %479 = vst.msk [vmem:[%s172 + $0xc8] sm:$0xff] %vm453, %v446
      %480 = vst.msk [vmem:[%s172 + $0xd0] sm:$0xff] %vm453, %v447
      %481 = vst.msk [vmem:[%s172 + $0xd8] sm:$0xff] %vm453, %v448
      %482 = vst.msk [vmem:[%s172 + $0xe0] sm:$0xff] %vm453, %v449
      %483 = vst.msk [vmem:[%s172 + $0xe8] sm:$0xff] %vm453, %v450
      %484 = vst.msk [vmem:[%s172 + $0xf0] sm:$0xff] %vm453, %v451
      %485 = vst.msk [vmem:[%s172 + $0xf8] sm:$0xff] %vm453, %v452
      %s486 = smul.u32 32, %s14
      %p487 = scmp.lt.s32.totalorder %s486, 63
      %s488 = scalar_select %p487, %s486, 63
      %s489 = smul.addr %s488, 8
      %s490 = scalar_lea.vmem %s3, %s489
      // Predicated region
      $region33: #{sstkad_forward.5} parent=31 // pred_check
        %p491 = pneg %p100
      $region34: #{sstkad_forward.5} parent=31 // pred_check_branch
        %493 = sbr.rel (%p491) target = $region36
      $region35: #{sstkad_forward.5} parent=31 // pred_region
        %s494 = smul.u32 32, %s14
      $region36: #{sstkad_forward.5} parent=31 // pred_fallthru
        _
    $region32: #{sstkad_forward.5} parent=5 // pred_fallthru
      _
    %p495 = scmp.le.s32.totalorder 2, %s9
    // Predicated region
    $region37: #{sstkad_forward.5} parent=5 // pred_check
      %p496 = pneg %p495
    $region38: #{sstkad_forward.5} parent=5 // pred_check_branch
      %498 = sbr.rel (%p496) target = $region40
    $region39: #{sstkad_forward.5} parent=5 // pred_region
      %s499 = ssub.s32 %s9, 2
      // Predicated region
      $region41: #{sstkad_forward.5} parent=39 // pred_check
        %p500 = pneg %p106
      $region42: #{sstkad_forward.5} parent=39 // pred_check_branch
        %502 = sbr.rel (%p500) target = $region44
      $region43: #{sstkad_forward.5} parent=39 // pred_region
        %s503 = smul.u32 32, %s15
        %p504 = scmp.lt.s32.totalorder %s503, 63
        %s505 = scalar_select %p504, %s503, 63
        %s506 = smul.addr %s505, 8
        %s507 = scalar_lea.vmem %s3, %s506
      $region44: #{sstkad_forward.5} parent=39 // pred_fallthru
        _
    $region40: #{sstkad_forward.5} parent=5 // pred_fallthru
      _
  $region6: #{sstkad_forward.5} parent=0 // loop_footer
    %s13 = sadd.s32 1, %s9
  $region7: #{sstkad_forward.5} parent=0 // loop_footer_branch
    %8 = sbr.rel target = $region3
  $region8: #{sstkad_forward.5} parent=0 // loop_exit
    _

// kernel: sstkad_forward.6
$region0: #{sstkad_forward.6}
  #allocation0 [shape = 'u32[]', space=smem, size = 0x4, offset = 0x4, fixed_abs, tag = 'smem constant byte address 0x4 - core index']
  #allocation1 [shape = 'u32[72,128]{1,0:T(1,128)}', space=vmem, size = 0x9000, scoped, tag = 'internal scratch']
  %s0 = inlined_call_operand.vmem [shape: f32[32,64], index: 0, kind: input, shape index: {}]
  %s1 = inlined_call_operand.vmem [shape: f32[64,16], index: 1, kind: input, shape index: {}]
  %s2 = inlined_call_operand.vmem [shape: f32[1,16], index: 2, kind: input, shape index: {}]
  %s3 = inlined_call_operand.vmem [shape: f32[32,16], index: 3, kind: output, shape index: {}]
  %s4 = sld [smem:[#allocation0]]
  $region22: #{sstkad_forward.6} parent=0
    _
  %s6 = ssub.s32 1, %s4
  %s7 = scalar_select 0, %s6, %s4
  // Predicated region
  $region2: #{sstkad_forward.6} parent=0 // pred_check
    _
  $region3: #{sstkad_forward.6} parent=0 // pred_check_branch
    %9 = sbr.rel (0) target = $region5
  $region4: #{sstkad_forward.6} parent=0 // pred_region
    _
  $region5: #{sstkad_forward.6} parent=0 // pred_fallthru
    _
  // Predicated region
  $region6: #{sstkad_forward.6} parent=0 // pred_check
    _
  $region7: #{sstkad_forward.6} parent=0 // pred_check_branch
    %11 = sbr.rel (0) target = $region9
  $region8: #{sstkad_forward.6} parent=0 // pred_region
    _
  $region9: #{sstkad_forward.6} parent=0 // pred_fallthru
    _
  // Predicated region
  $region10: #{sstkad_forward.6} parent=0 // pred_check
    _
  $region11: #{sstkad_forward.6} parent=0 // pred_check_branch
    %13 = sbr.rel (0) target = $region13
  $region12: #{sstkad_forward.6} parent=0 // pred_region
    _
  $region13: #{sstkad_forward.6} parent=0 // pred_fallthru
    _
  %v14 = vld [vmem:[%s0] sm:$0xff]
  %v15 = vld [vmem:[%s0 + $0x8] sm:$0xff]
  %v16 = vld [vmem:[%s0 + $0x10] sm:$0xff]
  %v17 = vld [vmem:[%s0 + $0x18] sm:$0xff]
  %v18 = vld [vmem:[%s1] sm:$0xff]
  %v19 = vld [vmem:[%s1 + $0x8] sm:$0xff]
  %v20 = vld [vmem:[%s1 + $0x10] sm:$0xff]
  %v21 = vld [vmem:[%s1 + $0x18] sm:$0xff]
  %v22 = vld [vmem:[%s1 + $0x20] sm:$0xff]
  %v23 = vld [vmem:[%s1 + $0x28] sm:$0xff]
  %v24 = vld [vmem:[%s1 + $0x30] sm:$0xff]
  %v25 = vld [vmem:[%s1 + $0x38] sm:$0xff]
  %v26 = vld [vmem:[%s2] sm:$0x1]
  %v28 = vperm.slane %v26, 0
  %vm30 = vcmask 523264
  %v32 = vsel %vm30, %v14, 0
  %v35 = vsel %vm30, %v15, 0
  %v38 = vsel %vm30, %v16, 0
  %v41 = vsel %vm30, %v17, 0
  %43 = vmatpush.msra.mxu0 0.0
  %44 = vmatpush.msra.mxu0 0.0
  %45 = vmatpush.msra.mxu0 0.0
  %46 = vmatpush.msra.mxu0 0.0
  %47 = vmatpush.msra.mxu0 0.0
  %48 = vmatpush.msra.mxu0 0.0
  %49 = vmatpush.msra.mxu0 0.0
  %50 = vmatpush.msra.mxu0 0.0
  %51 = vmatpush.msra.mxu0 %v25
  %52 = vmatpush.msra.mxu0 %v24
  %53 = vmatpush.msra.mxu0 %v23
  %54 = vmatpush.msra.mxu0 %v22
  %55 = vmatpush.msra.mxu0 %v21
  %56 = vmatpush.msra.mxu0 %v20
  %57 = vmatpush.msra.mxu0 %v19
  %58 = vmatpush.msra.mxu0 %v18
  %59 = vmatmul.f32.gmra.mxu0 %v32
  %v60 = vpop.f32.mrf.mxu0
  %v61 = vadd.f32 %v28, %v60
  %62 = vmatmul.f32.gmra.mxu0 %v35
  %v63 = vpop.f32.mrf.mxu0
  %v64 = vadd.f32 %v28, %v63
  %65 = vmatmul.f32.gmra.mxu0 %v38
  %v66 = vpop.f32.mrf.mxu0
  %v67 = vadd.f32 %v28, %v66
  %68 = vmatmul.f32.gmra.mxu0 %v41
  %v69 = vpop.f32.mrf.mxu0
  %v70 = vadd.f32 %v28, %v69
  %71 = vdwg.mxu0
  %v72 = vmax.f32 %v61, 0.0
  %v73 = vmax.f32 %v64, 0.0
  %v74 = vmax.f32 %v67, 0.0
  %v75 = vmax.f32 %v70, 0.0
  %vm76 = vcmask 130048
  %77 = vst.msk [vmem:[%s3] sm:$0xff] %vm76, %v72
  %78 = vst.msk [vmem:[%s3 + $0x8] sm:$0xff] %vm76, %v73
  %79 = vst.msk [vmem:[%s3 + $0x10] sm:$0xff] %vm76, %v74
  %80 = vst.msk [vmem:[%s3 + $0x18] sm:$0xff] %vm76, %v75
  // Predicated region
  $region14: #{sstkad_forward.6} parent=0 // pred_check
    _
  $region15: #{sstkad_forward.6} parent=0 // pred_check_branch
    %82 = sbr.rel (0) target = $region17
  $region16: #{sstkad_forward.6} parent=0 // pred_region
    _
  $region17: #{sstkad_forward.6} parent=0 // pred_fallthru
    _
  // Predicated region
  $region18: #{sstkad_forward.6} parent=0 // pred_check
    _
  $region19: #{sstkad_forward.6} parent=0 // pred_check_branch
    %84 = sbr.rel (0) target = $region21
  $region20: #{sstkad_forward.6} parent=0 // pred_region
    _
  $region21: #{sstkad_forward.6} parent=0 // pred_fallthru
    _

// kernel: sstkad_forward.7
$region0: #{sstkad_forward.7}
  #allocation0 [shape = 'u32[]', space=smem, size = 0x4, offset = 0x4, fixed_abs, tag = 'smem constant byte address 0x4 - core index']
  #allocation1 [shape = 'u32[72,128]{1,0:T(1,128)}', space=vmem, size = 0x9000, scoped, tag = 'internal scratch']
  %s0 = inlined_call_operand.vmem [shape: f32[4,64,16], index: 0, kind: input, shape index: {}]
  %s1 = inlined_call_operand.vmem [shape: f32[4,18,16], index: 1, kind: output, shape index: {}]
  %s2 = sld [smem:[#allocation0]]
  $region37: #{sstkad_forward.7} parent=0
    _
  %s4 = ssub.s32 1, %s2
  %s5 = scalar_select 0, %s4, %s2
  loop: start=0, step=1, limit=6
  $region2: #{sstkad_forward.7} parent=0 // loop_pre_header
    _
  $region3: #{sstkad_forward.7} parent=0 // loop_header
    %s7 = sphi 0, %s11
    %p8 = scmp.ge.s32.totalorder %s7, 6
    %s17 = sphi 0, %s19
    %s20 = sphi 0, %s17
    %s21 = sphi 0, %s20
    %s37 = sphi 0, %s21
    %s43 = sphi 0, %s45
    %s46 = sphi 0, %s43
    %s47 = sphi 0, %s46
    %s63 = sphi 0, %s47
  $region4: #{sstkad_forward.7} parent=0 // loop_header_branch
    %10 = sbr.rel (%p8) target = $region8
  $region5: #{sstkad_forward.7} parent=0 // loop_body
    %s12 = ssub.s32 %s7, 1
    %s13 = ssub.s32 %s7, 2
    %s14 = sadd.s32 %s7, 1
    %s15 = ssub.s32 %s7, %s14
    %p16 = scmp.eq.s32.totalorder %s15, 0
    %s18 = sadd.s32 %s17, 1
    %s19 = scalar_select %p16, %s17, %s18
    %p22 = pneg %p16
    %p23 = scmp.eq.s32.totalorder %s7, 3
    %p24 = por %p22, %p23
    %p25 = scmp.ne.s32.totalorder %s17, %s20
    %p26 = scmp.eq.s32.totalorder %s7, 0
    %p27 = por %p25, %p26
    %p28 = scmp.ne.s32.totalorder %s17, %s20
    %p29 = scmp.eq.s32.totalorder %s12, 3
    %p30 = por %p28, %p29
    %p31 = scmp.ne.s32.totalorder %s20, %s21
    %p32 = scmp.eq.s32.totalorder %s12, 0
    %p33 = por %p31, %p32
    %p34 = scmp.ne.s32.totalorder %s20, %s21
    %p35 = scmp.eq.s32.totalorder %s13, 3
    %p36 = por %p34, %p35
    %p38 = scmp.ne.s32.totalorder %s21, %s37
    %p39 = scmp.eq.s32.totalorder %s13, 0
    %p40 = por %p38, %p39
    %s41 = ssub.s32 %s7, %s14
    %p42 = scmp.eq.s32.totalorder %s41, 0
    %s44 = sadd.s32 %s43, 1
    %s45 = scalar_select %p42, %s43, %s44
    %p48 = pneg %p42
    %p49 = scmp.eq.s32.totalorder %s7, 3
    %p50 = por %p48, %p49
    %p51 = scmp.ne.s32.totalorder %s43, %s46
    %p52 = scmp.eq.s32.totalorder %s7, 0
    %p53 = por %p51, %p52
    %p54 = scmp.ne.s32.totalorder %s43, %s46
    %p55 = scmp.eq.s32.totalorder %s12, 3
    %p56 = por %p54, %p55
    %p57 = scmp.ne.s32.totalorder %s46, %s47
    %p58 = scmp.eq.s32.totalorder %s12, 0
    %p59 = por %p57, %p58
    %p60 = scmp.ne.s32.totalorder %s46, %s47
    %p61 = scmp.eq.s32.totalorder %s13, 3
    %p62 = por %p60, %p61
    %p64 = scmp.ne.s32.totalorder %s47, %s63
    %p65 = scmp.eq.s32.totalorder %s13, 0
    %p66 = por %p64, %p65
    %p67 = scmp.le.s32.totalorder 1, %s7
    %p68 = scmp.lt.s32.totalorder %s7, 5
    %p69 = pnand %p67, %p68
    %p70 = pneg %p69
    // Predicated region
    $region9: #{sstkad_forward.7} parent=5 // pred_check
      _
    $region10: #{sstkad_forward.7} parent=5 // pred_check_branch
      %72 = sbr.rel (%p69) target = $region12
    $region11: #{sstkad_forward.7} parent=5 // pred_region
      %s73 = ssub.s32 %s7, 1
    $region12: #{sstkad_forward.7} parent=5 // pred_fallthru
      _
    %p74 = scmp.lt.s32.totalorder %s7, 4
    // Predicated region
    $region13: #{sstkad_forward.7} parent=5 // pred_check
      %p75 = pneg %p74
    $region14: #{sstkad_forward.7} parent=5 // pred_check_branch
      %77 = sbr.rel (%p75) target = $region16
    $region15: #{sstkad_forward.7} parent=5 // pred_region
      // Predicated region
      $region17: #{sstkad_forward.7} parent=15 // pred_check
        %p78 = pneg %p27
      $region18: #{sstkad_forward.7} parent=15 // pred_check_branch
        %80 = sbr.rel (%p78) target = $region20
      $region19: #{sstkad_forward.7} parent=15 // pred_region
        %p81 = scmp.lt.s32.totalorder %s7, 3
        %s82 = scalar_select %p81, %s7, 3
        %s83 = smul.addr %s82, 8
        %s84 = smul.addr %s83, 8
        %s85 = scalar_lea.vmem %s0, %s84
      $region20: #{sstkad_forward.7} parent=15 // pred_fallthru
        _
    $region16: #{sstkad_forward.7} parent=5 // pred_fallthru
      _
    %p86 = scmp.le.s32.totalorder 1, %s7
    %p87 = scmp.lt.s32.totalorder %s7, 5
    %p88 = pnand %p86, %p87
    %p89 = pneg %p88
    // Predicated region
    $region21: #{sstkad_forward.7} parent=5 // pred_check
      _
    $region22: #{sstkad_forward.7} parent=5 // pred_check_branch
      %91 = sbr.rel (%p88) target = $region24
    $region23: #{sstkad_forward.7} parent=5 // pred_region
      %s92 = ssub.s32 %s7, 1
      %p93 = scmp.lt.s32.totalorder %s12, 3
      %s94 = scalar_select %p93, %s12, 3
      %s95 = smul.addr %s94, 8
      %s96 = smul.addr %s95, 8
      %s97 = scalar_lea.vmem %s0, %s96
      %p98 = pneg %p33
      %p99 = pneg %p30
      %p100 = pneg %p59
      %p101 = pneg %p56
      %p102 = scmp.lt.s32.totalorder %s12, 3
      %s103 = scalar_select %p102, %s12, 3
      %s104 = smul.addr %s103, 3
      %s105 = smul.addr %s104, 8
      %s106 = scalar_lea.vmem %s1, %s105
      %p107 = scmp.lt.s32.totalorder %s12, 3
      %s108 = scalar_select %p107, %s12, 3
      %s109 = smul.addr %s108, 8
      %s110 = smul.addr %s109, 8
      %s111 = scalar_lea.vmem %s0, %s110
      %p112 = scmp.lt.s32.totalorder %s12, 3
      %s113 = scalar_select %p112, %s12, 3
      %s114 = smul.addr %s113, 3
      %s115 = smul.addr %s114, 8
      %s116 = scalar_lea.vmem %s1, %s115
      %v117 = vld [vmem:[%s111] sm:$0xff]
      %v118 = vld [vmem:[%s111 + $0x8] sm:$0xff]
      %v119 = vld [vmem:[%s111 + $0x10] sm:$0xff]
      %v120 = vld [vmem:[%s111 + $0x18] sm:$0xff]
      %v121 = vld [vmem:[%s111 + $0x20] sm:$0xff]
      %v122 = vld [vmem:[%s111 + $0x28] sm:$0xff]
      %v123 = vld [vmem:[%s111 + $0x30] sm:$0xff]
      %v124 = vld [vmem:[%s111 + $0x38] sm:$0xff]
      %125 = vxpose.xlu0.b32.start [1/16] %v117, 128
      %126 = vxpose.xlu0.b32.cont [2/16] %v118, 128
      %127 = vxpose.xlu0.b32.cont [3/16] %v119, 128
      %128 = vxpose.xlu0.b32.cont [4/16] %v120, 128
      %129 = vxpose.xlu0.b32.cont [5/16] %v121, 128
      %130 = vxpose.xlu0.b32.cont [6/16] %v122, 128
      %131 = vxpose.xlu0.b32.cont [7/16] %v123, 128
      %132 = vxpose.xlu0.b32.cont [8/16] %v124, 128
      %133 = vxpose.xlu0.b32.cont [9/16] 0.0, 128
      %134 = vxpose.xlu0.b32.cont [10/16] 0.0, 128
      %135 = vxpose.xlu0.b32.cont [11/16] 0.0, 128
      %136 = vxpose.xlu0.b32.cont [12/16] 0.0, 128
      %137 = vxpose.xlu0.b32.cont [13/16] 0.0, 128
      %138 = vxpose.xlu0.b32.cont [14/16] 0.0, 128
      %139 = vxpose.xlu0.b32.cont [15/16] 0.0, 128
      %140 = vxpose.xlu0.b32.end [16/16] 0.0, 128
      %v141 = vpop.trf.xlu0
      %v142 = vpop.trf.xlu0
      %v143 = vpop.trf.xlu0
      %v144 = vpop.trf.xlu0
      %v145 = vpop.trf.xlu0
      %v146 = vpop.trf.xlu0
      %v147 = vpop.trf.xlu0
      %v148 = vpop.trf.xlu0
      %v149 = vpop.trf.xlu0
      %v150 = vpop.trf.xlu0
      %v151 = vpop.trf.xlu0
      %v152 = vpop.trf.xlu0
      %v153 = vpop.trf.xlu0
      %v154 = vpop.trf.xlu0
      %v155 = vpop.trf.xlu0
      %v156 = vpop.trf.xlu0
      %vm157 = vcmask 523264
      %v159 = vsel %vm157, %v141, 0
      %v162 = vsel %vm157, %v142, 0
      %164 = vmatpush.msra.mxu0 0.0
      %165 = vmatpush.msra.mxu0 0.0
      %166 = vmatpush.msra.mxu0 0.0
      %167 = vmatpush.msra.mxu0 0.0
      %168 = vmatpush.msra.mxu0 0.0
      %169 = vmatpush.msra.mxu0 0.0
      %170 = vmatpush.msra.mxu0 0.0
      %171 = vmatpush.msra.mxu0 0.0
      %172 = vmatpush.msra.mxu0 %v124
      %173 = vmatpush.msra.mxu0 %v123
      %174 = vmatpush.msra.mxu0 %v122
      %175 = vmatpush.msra.mxu0 %v121
      %176 = vmatpush.msra.mxu0 %v120
      %177 = vmatpush.msra.mxu0 %v119
      %178 = vmatpush.msra.mxu0 %v118
      %179 = vmatpush.msra.mxu0 %v117
      %180 = vmatmul.f32.gmra.mxu0 %v159
      %v181 = vpop.f32.mrf.mxu0
      %v182 = vadd.f32 0.0, %v181
      %183 = vmatmul.f32.gmra.mxu0 %v162
      %v184 = vpop.f32.mrf.mxu0
      %v185 = vadd.f32 0.0, %v184
      %186 = vdwg.mxu0
      %v187 = vmul.f32 %v182, 0.015625
      %v188 = vmul.f32 %v185, 0.015625
      %vm189 = vcmask 130048
      %v190 = vsel %vm189, %v117, 0.0
      %v191 = vsel %vm189, %v118, 0.0
      %v192 = vadd.f32 %v190, %v191
      %v193 = vsel %vm189, %v119, 0.0
      %v194 = vadd.f32 %v192, %v193
      %v195 = vsel %vm189, %v120, 0.0
      %v196 = vadd.f32 %v194, %v195
      %v197 = vsel %vm189, %v121, 0.0
      %v198 = vadd.f32 %v196, %v197
      %v199 = vsel %vm189, %v122, 0.0
      %v200 = vadd.f32 %v198, %v199
      %v201 = vsel %vm189, %v123, 0.0
      %v202 = vadd.f32 %v200, %v201
      %v203 = vsel %vm189, %v124, 0.0
      %v204 = vadd.f32 %v202, %v203
      %v205 = vrot.slane %v204, 4
      %v206 = vadd.f32 %v204, %v205
      %v207 = vrot.slane %v206, 2
      %v208 = vadd.f32 %v206, %v207
      %v209 = vrot.slane %v208, 1
      %v210 = vadd.f32 %v208, %v209
      %v211 = vrcp.pop 64.0
      %v212 = vmul.f32 64.0, %v211
      %v213 = vsub.f32 1.0, %v212
      %v214 = vmul.f32 %v211, %v213
      %v215 = vadd.f32 %v211, %v214
      %vm216 = vweird.f32 %v211
      %v217 = vsel %vm216, %v211, %v215
      %v218 = vmul.f32 %v210, %v217
      %v219 = vlaneseq
      %v220 = vshrl.u32 %v219, 7
      %v221 = vadd.s32 %v220, 8
      %v222 = vlaneseq
      %v223 = vand.u32 %v222, 127
      %vm224 = vcmp.eq.s32.totalorder %v220, %v223
      %vm225 = vcmp.eq.s32.totalorder %v221, %v223
      %v226 = vsel %vm224, %v187, 0.0
      %v227 = vsel %vm225, %v188, 0.0
      %v228 = vsel %vm189, %v226, 0.0
      %v229 = vsel %vm189, %v227, 0.0
      %v230 = vadd.f32 %v228, %v229
      %v231 = vrot.slane %v230, 4
      %v232 = vadd.f32 %v230, %v231
      %v233 = vrot.slane %v232, 2
      %v234 = vadd.f32 %v232, %v233
      %v235 = vrot.slane %v234, 1
      %v236 = vadd.f32 %v234, %v235
      %v237 = vmul.f32 %v218, %v218
      %v238 = vsub.f32 %v236, %v237
      %v239 = vmax.f32 %v238, 0.0
      %v240 = vadd.f32 %v239, 1e-06
      %v241 = vrsqrt.pop %v240
      %v242 = vmul.f32 %v241, %v240
      %v243 = vmul.f32 %v242, %v241
      %v244 = vmul.f32 0.5, %v243
      %v245 = vsub.f32 1.5, %v244
      %v246 = vmul.f32 %v241, %v245
      %v247 = vmul.f32 %v240, %v246
      %vm248 = vcmp.eq.f32.partialorder %v240, inf
      %v249 = vsel %vm248, %v240, %v247
      %vm250 = vcmp.eq.f32.partialorder %v240, 0.0
      %v251 = vand.u32 %v240, 2147483648
      %v252 = vsel %vm250, %v251, %v249
      %253 = vst.msk [vmem:[%s116] sm:$0xff] %vm189, %v187
      %254 = vst.msk [vmem:[%s116 + $0x8] sm:$0xff] %vm189, %v188
      %vm255 = vcmask 122880
      %256 = vst.msk [vmem:[%s116 + $0x10] sm:$0x1] %vm255, %v218
      %257 = vst.msk [vmem:[%s116 + $0x11] sm:$0x1] %vm255, %v252
      %p258 = scmp.lt.s32.totalorder %s12, 3
      %s259 = scalar_select %p258, %s12, 3
      %s260 = smul.addr %s259, 3
      %s261 = smul.addr %s260, 8
      %s262 = scalar_lea.vmem %s1, %s261
      // Predicated region
      $region25: #{sstkad_forward.7} parent=23 // pred_check
        %p263 = pneg %p56
      $region26: #{sstkad_forward.7} parent=23 // pred_check_branch
        %265 = sbr.rel (%p263) target = $region28
      $region27: #{sstkad_forward.7} parent=23 // pred_region
        _
      $region28: #{sstkad_forward.7} parent=23 // pred_fallthru
        _
    $region24: #{sstkad_forward.7} parent=5 // pred_fallthru
      _
    %p266 = scmp.le.s32.totalorder 2, %s7
    // Predicated region
    $region29: #{sstkad_forward.7} parent=5 // pred_check
      %p267 = pneg %p266
    $region30: #{sstkad_forward.7} parent=5 // pred_check_branch
      %269 = sbr.rel (%p267) target = $region32
    $region31: #{sstkad_forward.7} parent=5 // pred_region
      %s270 = ssub.s32 %s7, 2
      // Predicated region
      $region33: #{sstkad_forward.7} parent=31 // pred_check
        %p271 = pneg %p62
      $region34: #{sstkad_forward.7} parent=31 // pred_check_branch
        %273 = sbr.rel (%p271) target = $region36
      $region35: #{sstkad_forward.7} parent=31 // pred_region
        %p274 = scmp.lt.s32.totalorder %s13, 3
        %s275 = scalar_select %p274, %s13, 3
        %s276 = smul.addr %s275, 3
        %s277 = smul.addr %s276, 8
        %s278 = scalar_lea.vmem %s1, %s277
      $region36: #{sstkad_forward.7} parent=31 // pred_fallthru
        _
    $region32: #{sstkad_forward.7} parent=5 // pred_fallthru
      _
  $region6: #{sstkad_forward.7} parent=0 // loop_footer
    %s11 = sadd.s32 1, %s7
  $region7: #{sstkad_forward.7} parent=0 // loop_footer_branch
    %6 = sbr.rel target = $region3
  $region8: #{sstkad_forward.7} parent=0 // loop_exit
    _

</llo_original>
